<compile_context>
chip_gen: v5e
topology: v5e:2x2
jax: 0.10.0
libtpu: 0.0.40
codegen_flags: <defaults>
</compile_context>

<pallas_src>
import functools

import jax
import jax.numpy as jnp
from jax.experimental import pallas as pl
from jax.experimental.pallas import tpu as pltpu


def _round_up(x, m):
    return ((x + m - 1) // m) * m


# ----------------------------------------------------------------------------
# Fused kernel: LSTM recurrence + decoder linear + masked sequence CE partials
# ----------------------------------------------------------------------------
def fused_lstm_decoder_kernel(x_ref, lens_ref, tgt_ref,
                              w_ih_ref, w_hh_ref, b_rnn_ref,
                              w_dec_ref, b_dec_ref,
                              logits_ref, num_ref, den_ref,
                              h_scr, c_scr, pre_scr, hall_scr, mask_scr,
                              *, num_classes):
    # x_ref: (T, Bt, D) f32, lens_ref: (Bt, 1) i32, tgt_ref: (T, Bt, 1) i32
    # w_ih_ref: (D, 4Hp) bf16, w_hh_ref: (Hp, 4Hp) bf16, b_rnn_ref: (1, 4Hp) f32
    # w_dec_ref: (Hp, Lp) bf16, b_dec_ref: (1, Lp) f32
    # logits_ref: (T, Bt, Lp) f32, num_ref/den_ref: (8, 128) f32 (per-tile partials)
    T, Bt, D = x_ref.shape
    Hp = w_hh_ref.shape[0]
    Lp = w_dec_ref.shape[1]

    # --- hoisted input projection: ONE big MXU matmul for all timesteps ---
    # reshape (T,Bt,D)->(T*Bt,D) is layout-free for f32 since Bt % 8 == 0.
    x2 = x_ref[...].reshape(T * Bt, D).astype(jnp.bfloat16)
    pre_scr[...] = (jnp.dot(x2, w_ih_ref[...], preferred_element_type=jnp.float32)
                    + b_rnn_ref[...])

    h_scr[...] = jnp.zeros_like(h_scr)
    c_scr[...] = jnp.zeros_like(c_scr)

    w_hh = w_hh_ref[...]               # bf16, loop invariant
    lens_col = lens_ref[...]           # (Bt, 1) int32, loop invariant

    def step(t, carry):
        base = pl.multiple_of(t * Bt, 8)
        h = h_scr[...]
        c = c_scr[...]
        # single recurrent matmul per step on the serial critical path
        gates = pre_scr[pl.ds(base, Bt), :] + jnp.dot(
            h.astype(jnp.bfloat16), w_hh, preferred_element_type=jnp.float32)
        # gate layout [i, f, o, g]: one sigmoid over the contiguous 3Hp slab
        sig = jax.nn.sigmoid(gates[:, :3 * Hp])
        i_g = sig[:, 0 * Hp:1 * Hp]
        f_g = sig[:, 1 * Hp:2 * Hp]
        o_g = sig[:, 2 * Hp:3 * Hp]
        g_g = jnp.tanh(gates[:, 3 * Hp:4 * Hp])
        c_new = f_g * c + i_g * g_g
        h_new = o_g * jnp.tanh(c_new)
        # pack_padded_sequence emulation: cheap scalar-vs-length predicate
        m_b = t < lens_col                                    # (Bt, 1) bool
        h_scr[...] = jnp.where(m_b, h_new, h)
        c_scr[...] = jnp.where(m_b, c_new, c)
        hall_scr[pl.ds(base, Bt), :] = jnp.where(m_b, h_new, 0.0)
        mask_scr[pl.ds(base, Bt), :] = m_b.astype(jnp.float32)
        return carry

    unroll = True if T <= 16 else 8
    jax.lax.fori_loop(0, T, step, 0, unroll=unroll)

    # --- fused decoder + masked token-averaged CE on the VMEM-resident h ---
    logits2 = (jnp.dot(hall_scr[...].astype(jnp.bfloat16), w_dec_ref[...],
                       preferred_element_type=jnp.float32)
               + b_dec_ref[...])                              # (T*Bt, Lp) f32
    logits_ref[...] = logits2.reshape(T, Bt, Lp)

    # log_softmax over the *real* classes only (padded lanes masked out)
    lane = jax.lax.broadcasted_iota(jnp.int32, (T * Bt, Lp), 1)
    valid = lane < num_classes
    masked = jnp.where(valid, logits2, -1e30)
    mx = jnp.max(masked, axis=-1, keepdims=True)
    shifted = masked - mx
    lse = jnp.log(jnp.sum(jnp.exp(shifted), axis=-1, keepdims=True))
    log_probs = shifted - lse

    tgt2 = tgt_ref[...].reshape(T * Bt, 1)                    # layout-free (Bt%8==0)
    onehot = (lane == tgt2).astype(jnp.float32)
    nll = -jnp.sum(log_probs * onehot, axis=-1, keepdims=True)   # (T*Bt, 1)

    w = mask_scr[...]                                         # (T*Bt, 1)
    num_tile = jnp.sum(nll * w, keepdims=True)                # (1, 1)
    den_tile = jnp.sum(w, keepdims=True)                      # (1, 1)
    num_ref[...] = jnp.broadcast_to(num_tile, (8, 128))
    den_ref[...] = jnp.broadcast_to(den_tile, (8, 128))


def _pick_vmem_limit(T, Bt, D, Hp, Lp):
    f32, bf16, i32 = 4, 2, 4
    in_bytes = (T * Bt * D * f32 + Bt * i32 + T * Bt * i32
                + D * 4 * Hp * bf16 + Hp * 4 * Hp * bf16 + 4 * Hp * f32
                + Hp * Lp * bf16 + Lp * f32)
    out_bytes = T * Bt * Lp * f32 + 2 * 8 * 128 * f32
    scratch = (2 * Bt * Hp * f32 + T * Bt * 4 * Hp * f32
               + T * Bt * Hp * f32 + T * Bt * f32)
    need = 2 * (in_bytes + out_bytes) + scratch      # double-buffered pipeline
    # 2x margin for compiler temporaries; never the full physical VMEM (v7x = 64MiB)
    return int(max(16 << 20, min(48 << 20, 2 * need + (4 << 20))))


def run_fused(x_tbd, lens_b1, tgt_tb1, w_ih, w_hh, b_rnn, w_dec, b_dec,
              b_tile, label_size):
    T, B_pad, D = x_tbd.shape
    Hp, Hp4 = w_hh.shape
    Lp = w_dec.shape[1]
    n_tiles = B_pad // b_tile
    kernel = functools.partial(fused_lstm_decoder_kernel, num_classes=label_size)
    logits, num, den = pl.pallas_call(
        kernel,
        out_shape=(jax.ShapeDtypeStruct((T, B_pad, Lp), jnp.float32),
                   jax.ShapeDtypeStruct((n_tiles * 8, 128), jnp.float32),
                   jax.ShapeDtypeStruct((n_tiles * 8, 128), jnp.float32)),
        grid=(n_tiles,),
        in_specs=[
            pl.BlockSpec((T, b_tile, D), lambda b: (0, b, 0)),
            pl.BlockSpec((b_tile, 1), lambda b: (b, 0)),
            pl.BlockSpec((T, b_tile, 1), lambda b: (0, b, 0)),
            pl.BlockSpec((D, Hp4), lambda b: (0, 0)),
            pl.BlockSpec((Hp, Hp4), lambda b: (0, 0)),
            pl.BlockSpec((1, Hp4), lambda b: (0, 0)),
            pl.BlockSpec((Hp, Lp), lambda b: (0, 0)),
            pl.BlockSpec((1, Lp), lambda b: (0, 0)),
        ],
        out_specs=(pl.BlockSpec((T, b_tile, Lp), lambda b: (0, b, 0)),
                   pl.BlockSpec((8, 128), lambda b: (b, 0)),
                   pl.BlockSpec((8, 128), lambda b: (b, 0))),
        scratch_shapes=[
            pltpu.VMEM((b_tile, Hp), jnp.float32),          # h state
            pltpu.VMEM((b_tile, Hp), jnp.float32),          # c state
            pltpu.VMEM((T * b_tile, 4 * Hp), jnp.float32),  # hoisted pre-gates
            pltpu.VMEM((T * b_tile, Hp), jnp.float32),      # all hidden states
            pltpu.VMEM((T * b_tile, 1), jnp.float32),       # token mask
        ],
        compiler_params=pltpu.CompilerParams(
            dimension_semantics=("parallel",),              # batch tiles independent
            vmem_limit_bytes=_pick_vmem_limit(T, b_tile, D, Hp, Lp)),
    )(x_tbd, lens_b1, tgt_tb1, w_ih, w_hh, b_rnn, w_dec, b_dec)
    return logits, num, den


# ----------------------------------------------------------------------------
# Forward pass (glue in plain JAX, hot path in one Pallas kernel)
# ----------------------------------------------------------------------------
def sequence_labeling_forward(params, src, tgt, lpos, rpos):
    B, T = src.shape
    H = params["w_hh"].shape[0]
    label_size = params["w_dec"].shape[1]

    # lengths + descending sort (matches PyTorch forward; logits are returned
    # in sorted batch order, like the reference forward).
    lengths = jnp.sum((src > 0).astype(jnp.int32), axis=-1)
    indices = jnp.argsort(-lengths)
    src = src[indices]
    tgt = tgt[indices]
    lpos = lpos[indices]
    rpos = rpos[indices]

    # batch padding / tiling: sublane multiple of 8, cap 256 rows per tile,
    # prefer >= 2 tiles when B allows so the parallel grid axis can shard
    # across TensorCores (v7x megacore).
    B8 = _round_up(B, 8)
    if B8 >= 16:
        b_tile = min(256, _round_up(B8 // 2, 8))
    else:
        b_tile = B8
    B_pad = _round_up(B8, b_tile)
    pad_b = B_pad - B
    if pad_b:
        src = jnp.pad(src, ((0, pad_b), (0, 0)))
        tgt = jnp.pad(tgt, ((0, pad_b), (0, 0)))
        lpos = jnp.pad(lpos, ((0, pad_b), (0, 0)))
        rpos = jnp.pad(rpos, ((0, pad_b), (0, 0)))

    # time-major index arrays: transposing tiny int arrays avoids transposing
    # the large embedding activations afterwards.
    src_t, tgt_t, lpos_t, rpos_t = src.T, tgt.T, lpos.T, rpos.T   # (T, B_pad)

    # embedding lookups + concat (glue; table gather kept in plain JAX)
    src_e = jnp.take(params["src_emb"], src_t, axis=0)
    lpos_e = jnp.take(params["lpos_emb"], lpos_t, axis=0)
    rpos_e = jnp.take(params["rpos_emb"], rpos_t, axis=0)
    x_tbd = jnp.concatenate([src_e, lpos_e, rpos_e], axis=-1)     # (T, B_pad, D)

    lens_b1 = jnp.sum(src > 0, axis=-1).astype(jnp.int32)[:, None]   # (B_pad, 1)
    tgt_tb1 = tgt_t.astype(jnp.int32)[:, :, None]                    # (T, B_pad, 1)

    # pad hidden/label dims to full 128-lane groups (zero padding is exact);
    # pre-cast all matmul weights to bf16 ONCE (biases stay f32).
    Hp = _round_up(H, 128)
    Lp = _round_up(label_size, 128)
    D = x_tbd.shape[-1]
    w_ih = jnp.pad(params["w_ih"].reshape(D, 4, H),
                   ((0, 0), (0, 0), (0, Hp - H))
                   ).reshape(D, 4 * Hp).astype(jnp.bfloat16)
    w_hh = jnp.pad(params["w_hh"].reshape(H, 4, H),
                   ((0, Hp - H), (0, 0), (0, Hp - H))
                   ).reshape(Hp, 4 * Hp).astype(jnp.bfloat16)
    b_rnn = jnp.pad(params["b_rnn"].reshape(1, 4, H),
                    ((0, 0), (0, 0), (0, Hp - H))).reshape(1, 4 * Hp)
    w_dec = jnp.pad(params["w_dec"],
                    ((0, Hp - H), (0, Lp - label_size))).astype(jnp.bfloat16)
    b_dec = jnp.pad(params["b_dec"], ((0, 0), (0, Lp - label_size)))

    # --- single fused Pallas kernel: LSTM + decoder + CE partials ---
    logits_tbl, num, den = run_fused(x_tbd, lens_b1, tgt_tb1,
                                     w_ih, w_hh, b_rnn, w_dec, b_dec,
                                     b_tile, label_size)

    # finalize the token-averaged loss from per-tile partials (plain JAX)
    n_tiles = B_pad // b_tile
    num_p = num.reshape(n_tiles, 8 * 128)[:, 0]
    den_p = den.reshape(n_tiles, 8 * 128)[:, 0]
    loss = jnp.sum(num_p) / (jnp.sum(den_p) + 1e-13)

    logits = jnp.transpose(logits_tbl, (1, 0, 2))[:B, :, :label_size]  # (B,T,L)
    return {"loss": loss, "logits": logits}


# ----------------------------------------------------------------------------
# Deterministic parameter init (module-shaped, unpadded; gate order [i,f,o,g])
# ----------------------------------------------------------------------------
def init_params(key, vocab_size, emb_size, pos_emb_size, hidden_size,
                label_size, pos_size, rpos_size):
    d_in = emb_size + 2 * pos_emb_size
    ks = jax.random.split(key, 8)
    s = 0.1
    return {
        "src_emb": s * jax.random.normal(ks[0], (vocab_size, emb_size), jnp.float32),
        "lpos_emb": s * jax.random.normal(ks[1], (pos_size, pos_emb_size), jnp.float32),
        "rpos_emb": s * jax.random.normal(ks[2], (rpos_size, pos_emb_size), jnp.float32),
        "w_ih": s * jax.random.normal(ks[3], (d_in, 4 * hidden_size), jnp.float32),
        "w_hh": s * jax.random.normal(ks[4], (hidden_size, 4 * hidden_size), jnp.float32),
        "b_rnn": jnp.zeros((1, 4 * hidden_size), jnp.float32),
        "w_dec": s * jax.random.normal(ks[5], (hidden_size, label_size), jnp.float32),
        "b_dec": jnp.zeros((1, label_size), jnp.float32),
    }


if __name__ == "__main__":
    # module hyperparams (small, consistent with the PyTorch __init__)
    vocab_size, emb_size = 50, 24
    pos_emb_size, hidden_size = 4, 32
    label_size, pos_size, rpos_size = 8, 10, 10
    B, T = 2, 8

    key = jax.random.PRNGKey(0)
    k_par, k_src, k_tgt, k_lp, k_rp = jax.random.split(key, 5)
    params = init_params(k_par, vocab_size, emb_size, pos_emb_size,
                         hidden_size, label_size, pos_size, rpos_size)

    src = jax.random.randint(k_src, (B, T), 1, vocab_size, dtype=jnp.int32)
    # introduce some padding (token 0) at the tail of batch element 1
    src = src.at[1, 5:].set(0)
    tgt = jax.random.randint(k_tgt, (B, T), 0, label_size, dtype=jnp.int32)
    lpos = jax.random.randint(k_lp, (B, T), 0, pos_size, dtype=jnp.int32)
    rpos = jax.random.randint(k_rp, (B, T), 0, rpos_size, dtype=jnp.int32)

    out = jax.jit(sequence_labeling_forward)(params, src, tgt, lpos, rpos)
    jax.block_until_ready(out)

    assert out["logits"].shape == (B, T, label_size)
    assert out["loss"].shape == ()
    assert bool(jnp.isfinite(out["loss"]))
    assert bool(jnp.all(jnp.isfinite(out["logits"])))
    print("KERNEL_OK")
</pallas_src>

<mosaic_0001>
module attributes {stable_mosaic.version = 11 : i64} {
  func.func @fused_lstm_decoder_kernel(%arg0: i32, %arg1: memref<8x8x32xf32, #tpu.memory_space<vmem>>, %arg2: memref<8x1xi32, #tpu.memory_space<vmem>>, %arg3: memref<8x8x1xi32, #tpu.memory_space<vmem>>, %arg4: memref<32x512xbf16, #tpu.memory_space<vmem>>, %arg5: memref<128x512xbf16, #tpu.memory_space<vmem>>, %arg6: memref<1x512xf32, #tpu.memory_space<vmem>>, %arg7: memref<128x128xbf16, #tpu.memory_space<vmem>>, %arg8: memref<1x128xf32, #tpu.memory_space<vmem>>, %arg9: memref<8x8x128xf32, #tpu.memory_space<vmem>>, %arg10: memref<8x128xf32, #tpu.memory_space<vmem>>, %arg11: memref<8x128xf32, #tpu.memory_space<vmem>>, %arg12: memref<8x128xf32, #tpu.memory_space<vmem>>, %arg13: memref<8x128xf32, #tpu.memory_space<vmem>>, %arg14: memref<64x512xf32, #tpu.memory_space<vmem>>, %arg15: memref<64x128xf32, #tpu.memory_space<vmem>>, %arg16: memref<64x1xf32, #tpu.memory_space<vmem>>) attributes {dimension_semantics = [#tpu.dimension_semantics<parallel>], iteration_bounds = array<i64: 1>, scalar_prefetch = 0 : i64, scratch_operands = 5 : i64, tpu.core_type = #tpu.core_type<tc>, window_params = [{transform_indices = @transform_0, window_bounds = array<i64: 8, 8, 32>}, {transform_indices = @transform_1, window_bounds = array<i64: 8, 1>}, {transform_indices = @transform_2, window_bounds = array<i64: 8, 8, 1>}, {pipeline_mode = #tpu.pipeline_mode<synchronous>, transform_indices = @transform_3, window_bounds = array<i64: 32, 512>}, {pipeline_mode = #tpu.pipeline_mode<synchronous>, transform_indices = @transform_4, window_bounds = array<i64: 128, 512>}, {pipeline_mode = #tpu.pipeline_mode<synchronous>, transform_indices = @transform_5, window_bounds = array<i64: 1, 512>}, {pipeline_mode = #tpu.pipeline_mode<synchronous>, transform_indices = @transform_6, window_bounds = array<i64: 128, 128>}, {pipeline_mode = #tpu.pipeline_mode<synchronous>, transform_indices = @transform_7, window_bounds = array<i64: 1, 128>}, {transform_indices = @transform_8, window_bounds = array<i64: 8, 8, 128>}, {transform_indices = @transform_9, window_bounds = array<i64: 8, 128>}, {transform_indices = @transform_10, window_bounds = array<i64: 8, 128>}]} {
    %c0 = arith.constant 0 : index
    %c0_0 = arith.constant 0 : index
    %c0_1 = arith.constant 0 : index
    %0 = vector.load %arg1[%c0, %c0_0, %c0_1] : memref<8x8x32xf32, #tpu.memory_space<vmem>>, vector<8x8x32xf32>
    %1 = vector.shape_cast %0 : vector<8x8x32xf32> to vector<64x32xf32>
    %2 = arith.truncf %1 : vector<64x32xf32> to vector<64x32xbf16>
    %c0_2 = arith.constant 0 : index
    %c0_3 = arith.constant 0 : index
    %3 = vector.load %arg4[%c0_2, %c0_3] : memref<32x512xbf16, #tpu.memory_space<vmem>>, vector<32x512xbf16>
    %cst = arith.constant dense<0.000000e+00> : vector<64x512xf32>
    %4 = tpu.matmul %2, %3, %cst {dimension_numbers = #tpu.dot_dimension_numbers<[1], [0], [0], [1], [0, 0, 1, 1], [], []>} : vector<64x32xbf16>, vector<32x512xbf16>, vector<64x512xf32> -> vector<64x512xf32>
    %c0_4 = arith.constant 0 : index
    %c0_5 = arith.constant 0 : index
    %5 = vector.load %arg6[%c0_4, %c0_5] : memref<1x512xf32, #tpu.memory_space<vmem>>, vector<1x512xf32>
    %6 = vector.broadcast %5 : vector<1x512xf32> to vector<64x512xf32>
    %7 = arith.addf %4, %6 : vector<64x512xf32>
    %c0_6 = arith.constant 0 : index
    %c0_7 = arith.constant 0 : index
    %8 = vector.load %arg14[%c0_6, %c0_7] : memref<64x512xf32, #tpu.memory_space<vmem>>, vector<64x512xf32>
    tpu.vector_store %arg14[%c0_6, %c0_7], %7 {strides = array<i32>} : memref<64x512xf32, #tpu.memory_space<vmem>>, vector<64x512xf32>,
    %cst_8 = arith.constant 0.000000e+00 : f32
    %9 = vector.broadcast %cst_8 : f32 to vector<8x128xf32>
    %c0_9 = arith.constant 0 : index
    %c0_10 = arith.constant 0 : index
    %10 = vector.load %arg12[%c0_9, %c0_10] : memref<8x128xf32, #tpu.memory_space<vmem>>, vector<8x128xf32>
    tpu.vector_store %arg12[%c0_9, %c0_10], %9 {strides = array<i32>} : memref<8x128xf32, #tpu.memory_space<vmem>>, vector<8x128xf32>,
    %cst_11 = arith.constant 0.000000e+00 : f32
    %11 = vector.broadcast %cst_11 : f32 to vector<8x128xf32>
    %c0_12 = arith.constant 0 : index
    %c0_13 = arith.constant 0 : index
    %12 = vector.load %arg13[%c0_12, %c0_13] : memref<8x128xf32, #tpu.memory_space<vmem>>, vector<8x128xf32>
    tpu.vector_store %arg13[%c0_12, %c0_13], %11 {strides = array<i32>} : memref<8x128xf32, #tpu.memory_space<vmem>>, vector<8x128xf32>,
    %c0_14 = arith.constant 0 : index
    %c0_15 = arith.constant 0 : index
    %13 = vector.load %arg5[%c0_14, %c0_15] : memref<128x512xbf16, #tpu.memory_space<vmem>>, vector<128x512xbf16>
    %c0_16 = arith.constant 0 : index
    %c0_17 = arith.constant 0 : index
    %14 = vector.load %arg2[%c0_16, %c0_17] : memref<8x1xi32, #tpu.memory_space<vmem>>, vector<8x1xi32>
    %c0_i32 = arith.constant 0 : i32
    %c8_i32 = arith.constant 8 : i32
    %15 = arith.muli %c0_i32, %c8_i32 : i32
    %16 = tpu.assume_multiple %15, 8 : i32
    %c0_18 = arith.constant 0 : index
    %c0_19 = arith.constant 0 : index
    %17 = vector.load %arg12[%c0_18, %c0_19] : memref<8x128xf32, #tpu.memory_space<vmem>>, vector<8x128xf32>
    %c0_20 = arith.constant 0 : index
    %c0_21 = arith.constant 0 : index
    %18 = vector.load %arg13[%c0_20, %c0_21] : memref<8x128xf32, #tpu.memory_space<vmem>>, vector<8x128xf32>
    %19 = arith.index_cast %16 : i32 to index
    %c0_22 = arith.constant 0 : index
    %20 = vector.load %arg14[%19, %c0_22] : memref<64x512xf32, #tpu.memory_space<vmem>>, vector<8x512xf32>
    %21 = arith.truncf %17 : vector<8x128xf32> to vector<8x128xbf16>
    %cst_23 = arith.constant dense<0.000000e+00> : vector<8x512xf32>
    %22 = tpu.matmul %21, %13, %cst_23 {dimension_numbers = #tpu.dot_dimension_numbers<[1], [0], [0], [1], [0, 0, 1, 1], [], []>} : vector<8x128xbf16>, vector<128x512xbf16>, vector<8x512xf32> -> vector<8x512xf32>
    %23 = arith.addf %20, %22 : vector<8x512xf32>
    %24 = vector.extract_strided_slice %23 {offsets = [0, 0], sizes = [8, 384], strides = [1, 1]} : vector<8x512xf32> to vector<8x384xf32>
    %25 = arith.negf %24 : vector<8x384xf32>
    %26 = math.exp %25 : vector<8x384xf32>
    %cst_24 = arith.constant 1.000000e+00 : f32
    %27 = vector.broadcast %cst_24 : f32 to vector<8x384xf32>
    %28 = arith.addf %27, %26 : vector<8x384xf32>
    %29 = arith.divf %27, %28 : vector<8x384xf32>
    %30 = vector.extract_strided_slice %29 {offsets = [0, 0], sizes = [8, 128], strides = [1, 1]} : vector<8x384xf32> to vector<8x128xf32>
    %31 = vector.extract_strided_slice %29 {offsets = [0, 128], sizes = [8, 128], strides = [1, 1]} : vector<8x384xf32> to vector<8x128xf32>
    %32 = vector.extract_strided_slice %29 {offsets = [0, 256], sizes = [8, 128], strides = [1, 1]} : vector<8x384xf32> to vector<8x128xf32>
    %33 = vector.extract_strided_slice %23 {offsets = [0, 384], sizes = [8, 128], strides = [1, 1]} : vector<8x512xf32> to vector<8x128xf32>
    %34 = math.tanh %33 : vector<8x128xf32>
    %35 = arith.mulf %31, %18 : vector<8x128xf32>
    %36 = arith.mulf %30, %34 : vector<8x128xf32>
    %37 = arith.addf %35, %36 : vector<8x128xf32>
    %38 = math.tanh %37 : vector<8x128xf32>
    %39 = arith.mulf %32, %38 : vector<8x128xf32>
    %40 = vector.broadcast %c0_i32 : i32 to vector<8x1xi32>
    %41 = arith.cmpi slt, %40, %14 : vector<8x1xi32>
    %42 = vector.shape_cast %41 : vector<8x1xi1> to vector<8x1xi1>
    %43 = vector.broadcast %42 : vector<8x1xi1> to vector<8x128xi1>
    %44 = arith.select %43, %39, %17 : vector<8x128xi1>, vector<8x128xf32>
    %c0_25 = arith.constant 0 : index
    %c0_26 = arith.constant 0 : index
    %45 = vector.load %arg12[%c0_25, %c0_26] : memref<8x128xf32, #tpu.memory_space<vmem>>, vector<8x128xf32>
    tpu.vector_store %arg12[%c0_25, %c0_26], %44 {strides = array<i32>} : memref<8x128xf32, #tpu.memory_space<vmem>>, vector<8x128xf32>,
    %46 = vector.shape_cast %41 : vector<8x1xi1> to vector<8x1xi1>
    %47 = vector.broadcast %46 : vector<8x1xi1> to vector<8x128xi1>
    %48 = arith.select %47, %37, %18 : vector<8x128xi1>, vector<8x128xf32>
    %c0_27 = arith.constant 0 : index
    %c0_28 = arith.constant 0 : index
    %49 = vector.load %arg13[%c0_27, %c0_28] : memref<8x128xf32, #tpu.memory_space<vmem>>, vector<8x128xf32>
    tpu.vector_store %arg13[%c0_27, %c0_28], %48 {strides = array<i32>} : memref<8x128xf32, #tpu.memory_space<vmem>>, vector<8x128xf32>,
    %cst_29 = arith.constant 0.000000e+00 : f32
    %50 = vector.shape_cast %41 : vector<8x1xi1> to vector<8x1xi1>
    %51 = vector.broadcast %50 : vector<8x1xi1> to vector<8x128xi1>
    %52 = vector.broadcast %cst_29 : f32 to vector<8x128xf32>
    %53 = arith.select %51, %39, %52 : vector<8x128xi1>, vector<8x128xf32>
    %54 = arith.index_cast %16 : i32 to index
    %c0_30 = arith.constant 0 : index
    %55 = vector.load %arg15[%54, %c0_30] : memref<64x128xf32, #tpu.memory_space<vmem>>, vector<8x128xf32>
    tpu.vector_store %arg15[%54, %c0_30], %53 {strides = array<i32>} : memref<64x128xf32, #tpu.memory_space<vmem>>, vector<8x128xf32>,
    %56 = arith.extui %41 : vector<8x1xi1> to vector<8x1xi32>
    %57 = arith.sitofp %56 : vector<8x1xi32> to vector<8x1xf32>
    %58 = arith.index_cast %16 : i32 to index
    %c0_31 = arith.constant 0 : index
    %59 = vector.load %arg16[%58, %c0_31] : memref<64x1xf32, #tpu.memory_space<vmem>>, vector<8x1xf32>
    tpu.vector_store %arg16[%58, %c0_31], %57 {strides = array<i32>} : memref<64x1xf32, #tpu.memory_space<vmem>>, vector<8x1xf32>,
    %c1_i32 = arith.constant 1 : i32
    %c8_i32_32 = arith.constant 8 : i32
    %60 = arith.muli %c1_i32, %c8_i32_32 : i32
    %61 = tpu.assume_multiple %60, 8 : i32
    %c0_33 = arith.constant 0 : index
    %c0_34 = arith.constant 0 : index
    %62 = vector.load %arg12[%c0_33, %c0_34] : memref<8x128xf32, #tpu.memory_space<vmem>>, vector<8x128xf32>
    %c0_35 = arith.constant 0 : index
    %c0_36 = arith.constant 0 : index
    %63 = vector.load %arg13[%c0_35, %c0_36] : memref<8x128xf32, #tpu.memory_space<vmem>>, vector<8x128xf32>
    %64 = arith.index_cast %61 : i32 to index
    %c0_37 = arith.constant 0 : index
    %65 = vector.load %arg14[%64, %c0_37] : memref<64x512xf32, #tpu.memory_space<vmem>>, vector<8x512xf32>
    %66 = arith.truncf %62 : vector<8x128xf32> to vector<8x128xbf16>
    %cst_38 = arith.constant dense<0.000000e+00> : vector<8x512xf32>
    %67 = tpu.matmul %66, %13, %cst_38 {dimension_numbers = #tpu.dot_dimension_numbers<[1], [0], [0], [1], [0, 0, 1, 1], [], []>} : vector<8x128xbf16>, vector<128x512xbf16>, vector<8x512xf32> -> vector<8x512xf32>
    %68 = arith.addf %65, %67 : vector<8x512xf32>
    %69 = vector.extract_strided_slice %68 {offsets = [0, 0], sizes = [8, 384], strides = [1, 1]} : vector<8x512xf32> to vector<8x384xf32>
    %70 = arith.negf %69 : vector<8x384xf32>
    %71 = math.exp %70 : vector<8x384xf32>
    %cst_39 = arith.constant 1.000000e+00 : f32
    %72 = vector.broadcast %cst_39 : f32 to vector<8x384xf32>
    %73 = arith.addf %72, %71 : vector<8x384xf32>
    %74 = arith.divf %72, %73 : vector<8x384xf32>
    %75 = vector.extract_strided_slice %74 {offsets = [0, 0], sizes = [8, 128], strides = [1, 1]} : vector<8x384xf32> to vector<8x128xf32>
    %76 = vector.extract_strided_slice %74 {offsets = [0, 128], sizes = [8, 128], strides = [1, 1]} : vector<8x384xf32> to vector<8x128xf32>
    %77 = vector.extract_strided_slice %74 {offsets = [0, 256], sizes = [8, 128], strides = [1, 1]} : vector<8x384xf32> to vector<8x128xf32>
    %78 = vector.extract_strided_slice %68 {offsets = [0, 384], sizes = [8, 128], strides = [1, 1]} : vector<8x512xf32> to vector<8x128xf32>
    %79 = math.tanh %78 : vector<8x128xf32>
    %80 = arith.mulf %76, %63 : vector<8x128xf32>
    %81 = arith.mulf %75, %79 : vector<8x128xf32>
    %82 = arith.addf %80, %81 : vector<8x128xf32>
    %83 = math.tanh %82 : vector<8x128xf32>
    %84 = arith.mulf %77, %83 : vector<8x128xf32>
    %85 = vector.broadcast %c1_i32 : i32 to vector<8x1xi32>
    %86 = arith.cmpi slt, %85, %14 : vector<8x1xi32>
    %87 = vector.shape_cast %86 : vector<8x1xi1> to vector<8x1xi1>
    %88 = vector.broadcast %87 : vector<8x1xi1> to vector<8x128xi1>
    %89 = arith.select %88, %84, %62 : vector<8x128xi1>, vector<8x128xf32>
    %c0_40 = arith.constant 0 : index
    %c0_41 = arith.constant 0 : index
    %90 = vector.load %arg12[%c0_40, %c0_41] : memref<8x128xf32, #tpu.memory_space<vmem>>, vector<8x128xf32>
    tpu.vector_store %arg12[%c0_40, %c0_41], %89 {strides = array<i32>} : memref<8x128xf32, #tpu.memory_space<vmem>>, vector<8x128xf32>,
    %91 = vector.shape_cast %86 : vector<8x1xi1> to vector<8x1xi1>
    %92 = vector.broadcast %91 : vector<8x1xi1> to vector<8x128xi1>
    %93 = arith.select %92, %82, %63 : vector<8x128xi1>, vector<8x128xf32>
    %c0_42 = arith.constant 0 : index
    %c0_43 = arith.constant 0 : index
    %94 = vector.load %arg13[%c0_42, %c0_43] : memref<8x128xf32, #tpu.memory_space<vmem>>, vector<8x128xf32>
    tpu.vector_store %arg13[%c0_42, %c0_43], %93 {strides = array<i32>} : memref<8x128xf32, #tpu.memory_space<vmem>>, vector<8x128xf32>,
    %cst_44 = arith.constant 0.000000e+00 : f32
    %95 = vector.shape_cast %86 : vector<8x1xi1> to vector<8x1xi1>
    %96 = vector.broadcast %95 : vector<8x1xi1> to vector<8x128xi1>
    %97 = vector.broadcast %cst_44 : f32 to vector<8x128xf32>
    %98 = arith.select %96, %84, %97 : vector<8x128xi1>, vector<8x128xf32>
    %99 = arith.index_cast %61 : i32 to index
    %c0_45 = arith.constant 0 : index
    %100 = vector.load %arg15[%99, %c0_45] : memref<64x128xf32, #tpu.memory_space<vmem>>, vector<8x128xf32>
    tpu.vector_store %arg15[%99, %c0_45], %98 {strides = array<i32>} : memref<64x128xf32, #tpu.memory_space<vmem>>, vector<8x128xf32>,
    %101 = arith.extui %86 : vector<8x1xi1> to vector<8x1xi32>
    %102 = arith.sitofp %101 : vector<8x1xi32> to vector<8x1xf32>
    %103 = arith.index_cast %61 : i32 to index
    %c0_46 = arith.constant 0 : index
    %104 = vector.load %arg16[%103, %c0_46] : memref<64x1xf32, #tpu.memory_space<vmem>>, vector<8x1xf32>
    tpu.vector_store %arg16[%103, %c0_46], %102 {strides = array<i32>} : memref<64x1xf32, #tpu.memory_space<vmem>>, vector<8x1xf32>,
    %c2_i32 = arith.constant 2 : i32
    %c8_i32_47 = arith.constant 8 : i32
    %105 = arith.muli %c2_i32, %c8_i32_47 : i32
    %106 = tpu.assume_multiple %105, 8 : i32
    %c0_48 = arith.constant 0 : index
    %c0_49 = arith.constant 0 : index
    %107 = vector.load %arg12[%c0_48, %c0_49] : memref<8x128xf32, #tpu.memory_space<vmem>>, vector<8x128xf32>
    %c0_50 = arith.constant 0 : index
    %c0_51 = arith.constant 0 : index
    %108 = vector.load %arg13[%c0_50, %c0_51] : memref<8x128xf32, #tpu.memory_space<vmem>>, vector<8x128xf32>
    %109 = arith.index_cast %106 : i32 to index
    %c0_52 = arith.constant 0 : index
    %110 = vector.load %arg14[%109, %c0_52] : memref<64x512xf32, #tpu.memory_space<vmem>>, vector<8x512xf32>
    %111 = arith.truncf %107 : vector<8x128xf32> to vector<8x128xbf16>
    %cst_53 = arith.constant dense<0.000000e+00> : vector<8x512xf32>
    %112 = tpu.matmul %111, %13, %cst_53 {dimension_numbers = #tpu.dot_dimension_numbers<[1], [0], [0], [1], [0, 0, 1, 1], [], []>} : vector<8x128xbf16>, vector<128x512xbf16>, vector<8x512xf32> -> vector<8x512xf32>
    %113 = arith.addf %110, %112 : vector<8x512xf32>
    %114 = vector.extract_strided_slice %113 {offsets = [0, 0], sizes = [8, 384], strides = [1, 1]} : vector<8x512xf32> to vector<8x384xf32>
    %115 = arith.negf %114 : vector<8x384xf32>
    %116 = math.exp %115 : vector<8x384xf32>
    %cst_54 = arith.constant 1.000000e+00 : f32
    %117 = vector.broadcast %cst_54 : f32 to vector<8x384xf32>
    %118 = arith.addf %117, %116 : vector<8x384xf32>
    %119 = arith.divf %117, %118 : vector<8x384xf32>
    %120 = vector.extract_strided_slice %119 {offsets = [0, 0], sizes = [8, 128], strides = [1, 1]} : vector<8x384xf32> to vector<8x128xf32>
    %121 = vector.extract_strided_slice %119 {offsets = [0, 128], sizes = [8, 128], strides = [1, 1]} : vector<8x384xf32> to vector<8x128xf32>
    %122 = vector.extract_strided_slice %119 {offsets = [0, 256], sizes = [8, 128], strides = [1, 1]} : vector<8x384xf32> to vector<8x128xf32>
    %123 = vector.extract_strided_slice %113 {offsets = [0, 384], sizes = [8, 128], strides = [1, 1]} : vector<8x512xf32> to vector<8x128xf32>
    %124 = math.tanh %123 : vector<8x128xf32>
    %125 = arith.mulf %121, %108 : vector<8x128xf32>
    %126 = arith.mulf %120, %124 : vector<8x128xf32>
    %127 = arith.addf %125, %126 : vector<8x128xf32>
    %128 = math.tanh %127 : vector<8x128xf32>
    %129 = arith.mulf %122, %128 : vector<8x128xf32>
    %130 = vector.broadcast %c2_i32 : i32 to vector<8x1xi32>
    %131 = arith.cmpi slt, %130, %14 : vector<8x1xi32>
    %132 = vector.shape_cast %131 : vector<8x1xi1> to vector<8x1xi1>
    %133 = vector.broadcast %132 : vector<8x1xi1> to vector<8x128xi1>
    %134 = arith.select %133, %129, %107 : vector<8x128xi1>, vector<8x128xf32>
    %c0_55 = arith.constant 0 : index
    %c0_56 = arith.constant 0 : index
    %135 = vector.load %arg12[%c0_55, %c0_56] : memref<8x128xf32, #tpu.memory_space<vmem>>, vector<8x128xf32>
    tpu.vector_store %arg12[%c0_55, %c0_56], %134 {strides = array<i32>} : memref<8x128xf32, #tpu.memory_space<vmem>>, vector<8x128xf32>,
    %136 = vector.shape_cast %131 : vector<8x1xi1> to vector<8x1xi1>
    %137 = vector.broadcast %136 : vector<8x1xi1> to vector<8x128xi1>
    %138 = arith.select %137, %127, %108 : vector<8x128xi1>, vector<8x128xf32>
    %c0_57 = arith.constant 0 : index
    %c0_58 = arith.constant 0 : index
    %139 = vector.load %arg13[%c0_57, %c0_58] : memref<8x128xf32, #tpu.memory_space<vmem>>, vector<8x128xf32>
    tpu.vector_store %arg13[%c0_57, %c0_58], %138 {strides = array<i32>} : memref<8x128xf32, #tpu.memory_space<vmem>>, vector<8x128xf32>,
    %cst_59 = arith.constant 0.000000e+00 : f32
    %140 = vector.shape_cast %131 : vector<8x1xi1> to vector<8x1xi1>
    %141 = vector.broadcast %140 : vector<8x1xi1> to vector<8x128xi1>
    %142 = vector.broadcast %cst_59 : f32 to vector<8x128xf32>
    %143 = arith.select %141, %129, %142 : vector<8x128xi1>, vector<8x128xf32>
    %144 = arith.index_cast %106 : i32 to index
    %c0_60 = arith.constant 0 : index
    %145 = vector.load %arg15[%144, %c0_60] : memref<64x128xf32, #tpu.memory_space<vmem>>, vector<8x128xf32>
    tpu.vector_store %arg15[%144, %c0_60], %143 {strides = array<i32>} : memref<64x128xf32, #tpu.memory_space<vmem>>, vector<8x128xf32>,
    %146 = arith.extui %131 : vector<8x1xi1> to vector<8x1xi32>
    %147 = arith.sitofp %146 : vector<8x1xi32> to vector<8x1xf32>
    %148 = arith.index_cast %106 : i32 to index
    %c0_61 = arith.constant 0 : index
    %149 = vector.load %arg16[%148, %c0_61] : memref<64x1xf32, #tpu.memory_space<vmem>>, vector<8x1xf32>
    tpu.vector_store %arg16[%148, %c0_61], %147 {strides = array<i32>} : memref<64x1xf32, #tpu.memory_space<vmem>>, vector<8x1xf32>,
    %c3_i32 = arith.constant 3 : i32
    %c8_i32_62 = arith.constant 8 : i32
    %150 = arith.muli %c3_i32, %c8_i32_62 : i32
    %151 = tpu.assume_multiple %150, 8 : i32
    %c0_63 = arith.constant 0 : index
    %c0_64 = arith.constant 0 : index
    %152 = vector.load %arg12[%c0_63, %c0_64] : memref<8x128xf32, #tpu.memory_space<vmem>>, vector<8x128xf32>
    %c0_65 = arith.constant 0 : index
    %c0_66 = arith.constant 0 : index
    %153 = vector.load %arg13[%c0_65, %c0_66] : memref<8x128xf32, #tpu.memory_space<vmem>>, vector<8x128xf32>
    %154 = arith.index_cast %151 : i32 to index
    %c0_67 = arith.constant 0 : index
    %155 = vector.load %arg14[%154, %c0_67] : memref<64x512xf32, #tpu.memory_space<vmem>>, vector<8x512xf32>
    %156 = arith.truncf %152 : vector<8x128xf32> to vector<8x128xbf16>
    %cst_68 = arith.constant dense<0.000000e+00> : vector<8x512xf32>
    %157 = tpu.matmul %156, %13, %cst_68 {dimension_numbers = #tpu.dot_dimension_numbers<[1], [0], [0], [1], [0, 0, 1, 1], [], []>} : vector<8x128xbf16>, vector<128x512xbf16>, vector<8x512xf32> -> vector<8x512xf32>
    %158 = arith.addf %155, %157 : vector<8x512xf32>
    %159 = vector.extract_strided_slice %158 {offsets = [0, 0], sizes = [8, 384], strides = [1, 1]} : vector<8x512xf32> to vector<8x384xf32>
    %160 = arith.negf %159 : vector<8x384xf32>
    %161 = math.exp %160 : vector<8x384xf32>
    %cst_69 = arith.constant 1.000000e+00 : f32
    %162 = vector.broadcast %cst_69 : f32 to vector<8x384xf32>
    %163 = arith.addf %162, %161 : vector<8x384xf32>
    %164 = arith.divf %162, %163 : vector<8x384xf32>
    %165 = vector.extract_strided_slice %164 {offsets = [0, 0], sizes = [8, 128], strides = [1, 1]} : vector<8x384xf32> to vector<8x128xf32>
    %166 = vector.extract_strided_slice %164 {offsets = [0, 128], sizes = [8, 128], strides = [1, 1]} : vector<8x384xf32> to vector<8x128xf32>
    %167 = vector.extract_strided_slice %164 {offsets = [0, 256], sizes = [8, 128], strides = [1, 1]} : vector<8x384xf32> to vector<8x128xf32>
    %168 = vector.extract_strided_slice %158 {offsets = [0, 384], sizes = [8, 128], strides = [1, 1]} : vector<8x512xf32> to vector<8x128xf32>
    %169 = math.tanh %168 : vector<8x128xf32>
    %170 = arith.mulf %166, %153 : vector<8x128xf32>
    %171 = arith.mulf %165, %169 : vector<8x128xf32>
    %172 = arith.addf %170, %171 : vector<8x128xf32>
    %173 = math.tanh %172 : vector<8x128xf32>
    %174 = arith.mulf %167, %173 : vector<8x128xf32>
    %175 = vector.broadcast %c3_i32 : i32 to vector<8x1xi32>
    %176 = arith.cmpi slt, %175, %14 : vector<8x1xi32>
    %177 = vector.shape_cast %176 : vector<8x1xi1> to vector<8x1xi1>
    %178 = vector.broadcast %177 : vector<8x1xi1> to vector<8x128xi1>
    %179 = arith.select %178, %174, %152 : vector<8x128xi1>, vector<8x128xf32>
    %c0_70 = arith.constant 0 : index
    %c0_71 = arith.constant 0 : index
    %180 = vector.load %arg12[%c0_70, %c0_71] : memref<8x128xf32, #tpu.memory_space<vmem>>, vector<8x128xf32>
    tpu.vector_store %arg12[%c0_70, %c0_71], %179 {strides = array<i32>} : memref<8x128xf32, #tpu.memory_space<vmem>>, vector<8x128xf32>,
    %181 = vector.shape_cast %176 : vector<8x1xi1> to vector<8x1xi1>
    %182 = vector.broadcast %181 : vector<8x1xi1> to vector<8x128xi1>
    %183 = arith.select %182, %172, %153 : vector<8x128xi1>, vector<8x128xf32>
    %c0_72 = arith.constant 0 : index
    %c0_73 = arith.constant 0 : index
    %184 = vector.load %arg13[%c0_72, %c0_73] : memref<8x128xf32, #tpu.memory_space<vmem>>, vector<8x128xf32>
    tpu.vector_store %arg13[%c0_72, %c0_73], %183 {strides = array<i32>} : memref<8x128xf32, #tpu.memory_space<vmem>>, vector<8x128xf32>,
    %cst_74 = arith.constant 0.000000e+00 : f32
    %185 = vector.shape_cast %176 : vector<8x1xi1> to vector<8x1xi1>
    %186 = vector.broadcast %185 : vector<8x1xi1> to vector<8x128xi1>
    %187 = vector.broadcast %cst_74 : f32 to vector<8x128xf32>
    %188 = arith.select %186, %174, %187 : vector<8x128xi1>, vector<8x128xf32>
    %189 = arith.index_cast %151 : i32 to index
    %c0_75 = arith.constant 0 : index
    %190 = vector.load %arg15[%189, %c0_75] : memref<64x128xf32, #tpu.memory_space<vmem>>, vector<8x128xf32>
    tpu.vector_store %arg15[%189, %c0_75], %188 {strides = array<i32>} : memref<64x128xf32, #tpu.memory_space<vmem>>, vector<8x128xf32>,
    %191 = arith.extui %176 : vector<8x1xi1> to vector<8x1xi32>
    %192 = arith.sitofp %191 : vector<8x1xi32> to vector<8x1xf32>
    %193 = arith.index_cast %151 : i32 to index
    %c0_76 = arith.constant 0 : index
    %194 = vector.load %arg16[%193, %c0_76] : memref<64x1xf32, #tpu.memory_space<vmem>>, vector<8x1xf32>
    tpu.vector_store %arg16[%193, %c0_76], %192 {strides = array<i32>} : memref<64x1xf32, #tpu.memory_space<vmem>>, vector<8x1xf32>,
    %c4_i32 = arith.constant 4 : i32
    %c8_i32_77 = arith.constant 8 : i32
    %195 = arith.muli %c4_i32, %c8_i32_77 : i32
    %196 = tpu.assume_multiple %195, 8 : i32
    %c0_78 = arith.constant 0 : index
    %c0_79 = arith.constant 0 : index
    %197 = vector.load %arg12[%c0_78, %c0_79] : memref<8x128xf32, #tpu.memory_space<vmem>>, vector<8x128xf32>
    %c0_80 = arith.constant 0 : index
    %c0_81 = arith.constant 0 : index
    %198 = vector.load %arg13[%c0_80, %c0_81] : memref<8x128xf32, #tpu.memory_space<vmem>>, vector<8x128xf32>
    %199 = arith.index_cast %196 : i32 to index
    %c0_82 = arith.constant 0 : index
    %200 = vector.load %arg14[%199, %c0_82] : memref<64x512xf32, #tpu.memory_space<vmem>>, vector<8x512xf32>
    %201 = arith.truncf %197 : vector<8x128xf32> to vector<8x128xbf16>
    %cst_83 = arith.constant dense<0.000000e+00> : vector<8x512xf32>
    %202 = tpu.matmul %201, %13, %cst_83 {dimension_numbers = #tpu.dot_dimension_numbers<[1], [0], [0], [1], [0, 0, 1, 1], [], []>} : vector<8x128xbf16>, vector<128x512xbf16>, vector<8x512xf32> -> vector<8x512xf32>
    %203 = arith.addf %200, %202 : vector<8x512xf32>
    %204 = vector.extract_strided_slice %203 {offsets = [0, 0], sizes = [8, 384], strides = [1, 1]} : vector<8x512xf32> to vector<8x384xf32>
    %205 = arith.negf %204 : vector<8x384xf32>
    %206 = math.exp %205 : vector<8x384xf32>
    %cst_84 = arith.constant 1.000000e+00 : f32
    %207 = vector.broadcast %cst_84 : f32 to vector<8x384xf32>
    %208 = arith.addf %207, %206 : vector<8x384xf32>
    %209 = arith.divf %207, %208 : vector<8x384xf32>
    %210 = vector.extract_strided_slice %209 {offsets = [0, 0], sizes = [8, 128], strides = [1, 1]} : vector<8x384xf32> to vector<8x128xf32>
    %211 = vector.extract_strided_slice %209 {offsets = [0, 128], sizes = [8, 128], strides = [1, 1]} : vector<8x384xf32> to vector<8x128xf32>
    %212 = vector.extract_strided_slice %209 {offsets = [0, 256], sizes = [8, 128], strides = [1, 1]} : vector<8x384xf32> to vector<8x128xf32>
    %213 = vector.extract_strided_slice %203 {offsets = [0, 384], sizes = [8, 128], strides = [1, 1]} : vector<8x512xf32> to vector<8x128xf32>
    %214 = math.tanh %213 : vector<8x128xf32>
    %215 = arith.mulf %211, %198 : vector<8x128xf32>
    %216 = arith.mulf %210, %214 : vector<8x128xf32>
    %217 = arith.addf %215, %216 : vector<8x128xf32>
    %218 = math.tanh %217 : vector<8x128xf32>
    %219 = arith.mulf %212, %218 : vector<8x128xf32>
    %220 = vector.broadcast %c4_i32 : i32 to vector<8x1xi32>
    %221 = arith.cmpi slt, %220, %14 : vector<8x1xi32>
    %222 = vector.shape_cast %221 : vector<8x1xi1> to vector<8x1xi1>
    %223 = vector.broadcast %222 : vector<8x1xi1> to vector<8x128xi1>
    %224 = arith.select %223, %219, %197 : vector<8x128xi1>, vector<8x128xf32>
    %c0_85 = arith.constant 0 : index
    %c0_86 = arith.constant 0 : index
    %225 = vector.load %arg12[%c0_85, %c0_86] : memref<8x128xf32, #tpu.memory_space<vmem>>, vector<8x128xf32>
    tpu.vector_store %arg12[%c0_85, %c0_86], %224 {strides = array<i32>} : memref<8x128xf32, #tpu.memory_space<vmem>>, vector<8x128xf32>,
    %226 = vector.shape_cast %221 : vector<8x1xi1> to vector<8x1xi1>
    %227 = vector.broadcast %226 : vector<8x1xi1> to vector<8x128xi1>
    %228 = arith.select %227, %217, %198 : vector<8x128xi1>, vector<8x128xf32>
    %c0_87 = arith.constant 0 : index
    %c0_88 = arith.constant 0 : index
    %229 = vector.load %arg13[%c0_87, %c0_88] : memref<8x128xf32, #tpu.memory_space<vmem>>, vector<8x128xf32>
    tpu.vector_store %arg13[%c0_87, %c0_88], %228 {strides = array<i32>} : memref<8x128xf32, #tpu.memory_space<vmem>>, vector<8x128xf32>,
    %cst_89 = arith.constant 0.000000e+00 : f32
    %230 = vector.shape_cast %221 : vector<8x1xi1> to vector<8x1xi1>
    %231 = vector.broadcast %230 : vector<8x1xi1> to vector<8x128xi1>
    %232 = vector.broadcast %cst_89 : f32 to vector<8x128xf32>
    %233 = arith.select %231, %219, %232 : vector<8x128xi1>, vector<8x128xf32>
    %234 = arith.index_cast %196 : i32 to index
    %c0_90 = arith.constant 0 : index
    %235 = vector.load %arg15[%234, %c0_90] : memref<64x128xf32, #tpu.memory_space<vmem>>, vector<8x128xf32>
    tpu.vector_store %arg15[%234, %c0_90], %233 {strides = array<i32>} : memref<64x128xf32, #tpu.memory_space<vmem>>, vector<8x128xf32>,
    %236 = arith.extui %221 : vector<8x1xi1> to vector<8x1xi32>
    %237 = arith.sitofp %236 : vector<8x1xi32> to vector<8x1xf32>
    %238 = arith.index_cast %196 : i32 to index
    %c0_91 = arith.constant 0 : index
    %239 = vector.load %arg16[%238, %c0_91] : memref<64x1xf32, #tpu.memory_space<vmem>>, vector<8x1xf32>
    tpu.vector_store %arg16[%238, %c0_91], %237 {strides = array<i32>} : memref<64x1xf32, #tpu.memory_space<vmem>>, vector<8x1xf32>,
    %c5_i32 = arith.constant 5 : i32
    %c8_i32_92 = arith.constant 8 : i32
    %240 = arith.muli %c5_i32, %c8_i32_92 : i32
    %241 = tpu.assume_multiple %240, 8 : i32
    %c0_93 = arith.constant 0 : index
    %c0_94 = arith.constant 0 : index
    %242 = vector.load %arg12[%c0_93, %c0_94] : memref<8x128xf32, #tpu.memory_space<vmem>>, vector<8x128xf32>
    %c0_95 = arith.constant 0 : index
    %c0_96 = arith.constant 0 : index
    %243 = vector.load %arg13[%c0_95, %c0_96] : memref<8x128xf32, #tpu.memory_space<vmem>>, vector<8x128xf32>
    %244 = arith.index_cast %241 : i32 to index
    %c0_97 = arith.constant 0 : index
    %245 = vector.load %arg14[%244, %c0_97] : memref<64x512xf32, #tpu.memory_space<vmem>>, vector<8x512xf32>
    %246 = arith.truncf %242 : vector<8x128xf32> to vector<8x128xbf16>
    %cst_98 = arith.constant dense<0.000000e+00> : vector<8x512xf32>
    %247 = tpu.matmul %246, %13, %cst_98 {dimension_numbers = #tpu.dot_dimension_numbers<[1], [0], [0], [1], [0, 0, 1, 1], [], []>} : vector<8x128xbf16>, vector<128x512xbf16>, vector<8x512xf32> -> vector<8x512xf32>
    %248 = arith.addf %245, %247 : vector<8x512xf32>
    %249 = vector.extract_strided_slice %248 {offsets = [0, 0], sizes = [8, 384], strides = [1, 1]} : vector<8x512xf32> to vector<8x384xf32>
    %250 = arith.negf %249 : vector<8x384xf32>
    %251 = math.exp %250 : vector<8x384xf32>
    %cst_99 = arith.constant 1.000000e+00 : f32
    %252 = vector.broadcast %cst_99 : f32 to vector<8x384xf32>
    %253 = arith.addf %252, %251 : vector<8x384xf32>
    %254 = arith.divf %252, %253 : vector<8x384xf32>
    %255 = vector.extract_strided_slice %254 {offsets = [0, 0], sizes = [8, 128], strides = [1, 1]} : vector<8x384xf32> to vector<8x128xf32>
    %256 = vector.extract_strided_slice %254 {offsets = [0, 128], sizes = [8, 128], strides = [1, 1]} : vector<8x384xf32> to vector<8x128xf32>
    %257 = vector.extract_strided_slice %254 {offsets = [0, 256], sizes = [8, 128], strides = [1, 1]} : vector<8x384xf32> to vector<8x128xf32>
    %258 = vector.extract_strided_slice %248 {offsets = [0, 384], sizes = [8, 128], strides = [1, 1]} : vector<8x512xf32> to vector<8x128xf32>
    %259 = math.tanh %258 : vector<8x128xf32>
    %260 = arith.mulf %256, %243 : vector<8x128xf32>
    %261 = arith.mulf %255, %259 : vector<8x128xf32>
    %262 = arith.addf %260, %261 : vector<8x128xf32>
    %263 = math.tanh %262 : vector<8x128xf32>
    %264 = arith.mulf %257, %263 : vector<8x128xf32>
    %265 = vector.broadcast %c5_i32 : i32 to vector<8x1xi32>
    %266 = arith.cmpi slt, %265, %14 : vector<8x1xi32>
    %267 = vector.shape_cast %266 : vector<8x1xi1> to vector<8x1xi1>
    %268 = vector.broadcast %267 : vector<8x1xi1> to vector<8x128xi1>
    %269 = arith.select %268, %264, %242 : vector<8x128xi1>, vector<8x128xf32>
    %c0_100 = arith.constant 0 : index
    %c0_101 = arith.constant 0 : index
    %270 = vector.load %arg12[%c0_100, %c0_101] : memref<8x128xf32, #tpu.memory_space<vmem>>, vector<8x128xf32>
    tpu.vector_store %arg12[%c0_100, %c0_101], %269 {strides = array<i32>} : memref<8x128xf32, #tpu.memory_space<vmem>>, vector<8x128xf32>,
    %271 = vector.shape_cast %266 : vector<8x1xi1> to vector<8x1xi1>
    %272 = vector.broadcast %271 : vector<8x1xi1> to vector<8x128xi1>
    %273 = arith.select %272, %262, %243 : vector<8x128xi1>, vector<8x128xf32>
    %c0_102 = arith.constant 0 : index
    %c0_103 = arith.constant 0 : index
    %274 = vector.load %arg13[%c0_102, %c0_103] : memref<8x128xf32, #tpu.memory_space<vmem>>, vector<8x128xf32>
    tpu.vector_store %arg13[%c0_102, %c0_103], %273 {strides = array<i32>} : memref<8x128xf32, #tpu.memory_space<vmem>>, vector<8x128xf32>,
    %cst_104 = arith.constant 0.000000e+00 : f32
    %275 = vector.shape_cast %266 : vector<8x1xi1> to vector<8x1xi1>
    %276 = vector.broadcast %275 : vector<8x1xi1> to vector<8x128xi1>
    %277 = vector.broadcast %cst_104 : f32 to vector<8x128xf32>
    %278 = arith.select %276, %264, %277 : vector<8x128xi1>, vector<8x128xf32>
    %279 = arith.index_cast %241 : i32 to index
    %c0_105 = arith.constant 0 : index
    %280 = vector.load %arg15[%279, %c0_105] : memref<64x128xf32, #tpu.memory_space<vmem>>, vector<8x128xf32>
    tpu.vector_store %arg15[%279, %c0_105], %278 {strides = array<i32>} : memref<64x128xf32, #tpu.memory_space<vmem>>, vector<8x128xf32>,
    %281 = arith.extui %266 : vector<8x1xi1> to vector<8x1xi32>
    %282 = arith.sitofp %281 : vector<8x1xi32> to vector<8x1xf32>
    %283 = arith.index_cast %241 : i32 to index
    %c0_106 = arith.constant 0 : index
    %284 = vector.load %arg16[%283, %c0_106] : memref<64x1xf32, #tpu.memory_space<vmem>>, vector<8x1xf32>
    tpu.vector_store %arg16[%283, %c0_106], %282 {strides = array<i32>} : memref<64x1xf32, #tpu.memory_space<vmem>>, vector<8x1xf32>,
    %c6_i32 = arith.constant 6 : i32
    %c8_i32_107 = arith.constant 8 : i32
    %285 = arith.muli %c6_i32, %c8_i32_107 : i32
    %286 = tpu.assume_multiple %285, 8 : i32
    %c0_108 = arith.constant 0 : index
    %c0_109 = arith.constant 0 : index
    %287 = vector.load %arg12[%c0_108, %c0_109] : memref<8x128xf32, #tpu.memory_space<vmem>>, vector<8x128xf32>
    %c0_110 = arith.constant 0 : index
    %c0_111 = arith.constant 0 : index
    %288 = vector.load %arg13[%c0_110, %c0_111] : memref<8x128xf32, #tpu.memory_space<vmem>>, vector<8x128xf32>
    %289 = arith.index_cast %286 : i32 to index
    %c0_112 = arith.constant 0 : index
    %290 = vector.load %arg14[%289, %c0_112] : memref<64x512xf32, #tpu.memory_space<vmem>>, vector<8x512xf32>
    %291 = arith.truncf %287 : vector<8x128xf32> to vector<8x128xbf16>
    %cst_113 = arith.constant dense<0.000000e+00> : vector<8x512xf32>
    %292 = tpu.matmul %291, %13, %cst_113 {dimension_numbers = #tpu.dot_dimension_numbers<[1], [0], [0], [1], [0, 0, 1, 1], [], []>} : vector<8x128xbf16>, vector<128x512xbf16>, vector<8x512xf32> -> vector<8x512xf32>
    %293 = arith.addf %290, %292 : vector<8x512xf32>
    %294 = vector.extract_strided_slice %293 {offsets = [0, 0], sizes = [8, 384], strides = [1, 1]} : vector<8x512xf32> to vector<8x384xf32>
    %295 = arith.negf %294 : vector<8x384xf32>
    %296 = math.exp %295 : vector<8x384xf32>
    %cst_114 = arith.constant 1.000000e+00 : f32
    %297 = vector.broadcast %cst_114 : f32 to vector<8x384xf32>
    %298 = arith.addf %297, %296 : vector<8x384xf32>
    %299 = arith.divf %297, %298 : vector<8x384xf32>
    %300 = vector.extract_strided_slice %299 {offsets = [0, 0], sizes = [8, 128], strides = [1, 1]} : vector<8x384xf32> to vector<8x128xf32>
    %301 = vector.extract_strided_slice %299 {offsets = [0, 128], sizes = [8, 128], strides = [1, 1]} : vector<8x384xf32> to vector<8x128xf32>
    %302 = vector.extract_strided_slice %299 {offsets = [0, 256], sizes = [8, 128], strides = [1, 1]} : vector<8x384xf32> to vector<8x128xf32>
    %303 = vector.extract_strided_slice %293 {offsets = [0, 384], sizes = [8, 128], strides = [1, 1]} : vector<8x512xf32> to vector<8x128xf32>
    %304 = math.tanh %303 : vector<8x128xf32>
    %305 = arith.mulf %301, %288 : vector<8x128xf32>
    %306 = arith.mulf %300, %304 : vector<8x128xf32>
    %307 = arith.addf %305, %306 : vector<8x128xf32>
    %308 = math.tanh %307 : vector<8x128xf32>
    %309 = arith.mulf %302, %308 : vector<8x128xf32>
    %310 = vector.broadcast %c6_i32 : i32 to vector<8x1xi32>
    %311 = arith.cmpi slt, %310, %14 : vector<8x1xi32>
    %312 = vector.shape_cast %311 : vector<8x1xi1> to vector<8x1xi1>
    %313 = vector.broadcast %312 : vector<8x1xi1> to vector<8x128xi1>
    %314 = arith.select %313, %309, %287 : vector<8x128xi1>, vector<8x128xf32>
    %c0_115 = arith.constant 0 : index
    %c0_116 = arith.constant 0 : index
    %315 = vector.load %arg12[%c0_115, %c0_116] : memref<8x128xf32, #tpu.memory_space<vmem>>, vector<8x128xf32>
    tpu.vector_store %arg12[%c0_115, %c0_116], %314 {strides = array<i32>} : memref<8x128xf32, #tpu.memory_space<vmem>>, vector<8x128xf32>,
    %316 = vector.shape_cast %311 : vector<8x1xi1> to vector<8x1xi1>
    %317 = vector.broadcast %316 : vector<8x1xi1> to vector<8x128xi1>
    %318 = arith.select %317, %307, %288 : vector<8x128xi1>, vector<8x128xf32>
    %c0_117 = arith.constant 0 : index
    %c0_118 = arith.constant 0 : index
    %319 = vector.load %arg13[%c0_117, %c0_118] : memref<8x128xf32, #tpu.memory_space<vmem>>, vector<8x128xf32>
    tpu.vector_store %arg13[%c0_117, %c0_118], %318 {strides = array<i32>} : memref<8x128xf32, #tpu.memory_space<vmem>>, vector<8x128xf32>,
    %cst_119 = arith.constant 0.000000e+00 : f32
    %320 = vector.shape_cast %311 : vector<8x1xi1> to vector<8x1xi1>
    %321 = vector.broadcast %320 : vector<8x1xi1> to vector<8x128xi1>
    %322 = vector.broadcast %cst_119 : f32 to vector<8x128xf32>
    %323 = arith.select %321, %309, %322 : vector<8x128xi1>, vector<8x128xf32>
    %324 = arith.index_cast %286 : i32 to index
    %c0_120 = arith.constant 0 : index
    %325 = vector.load %arg15[%324, %c0_120] : memref<64x128xf32, #tpu.memory_space<vmem>>, vector<8x128xf32>
    tpu.vector_store %arg15[%324, %c0_120], %323 {strides = array<i32>} : memref<64x128xf32, #tpu.memory_space<vmem>>, vector<8x128xf32>,
    %326 = arith.extui %311 : vector<8x1xi1> to vector<8x1xi32>
    %327 = arith.sitofp %326 : vector<8x1xi32> to vector<8x1xf32>
    %328 = arith.index_cast %286 : i32 to index
    %c0_121 = arith.constant 0 : index
    %329 = vector.load %arg16[%328, %c0_121] : memref<64x1xf32, #tpu.memory_space<vmem>>, vector<8x1xf32>
    tpu.vector_store %arg16[%328, %c0_121], %327 {strides = array<i32>} : memref<64x1xf32, #tpu.memory_space<vmem>>, vector<8x1xf32>,
    %c7_i32 = arith.constant 7 : i32
    %c8_i32_122 = arith.constant 8 : i32
    %330 = arith.muli %c7_i32, %c8_i32_122 : i32
    %331 = tpu.assume_multiple %330, 8 : i32
    %c0_123 = arith.constant 0 : index
    %c0_124 = arith.constant 0 : index
    %332 = vector.load %arg12[%c0_123, %c0_124] : memref<8x128xf32, #tpu.memory_space<vmem>>, vector<8x128xf32>
    %c0_125 = arith.constant 0 : index
    %c0_126 = arith.constant 0 : index
    %333 = vector.load %arg13[%c0_125, %c0_126] : memref<8x128xf32, #tpu.memory_space<vmem>>, vector<8x128xf32>
    %334 = arith.index_cast %331 : i32 to index
    %c0_127 = arith.constant 0 : index
    %335 = vector.load %arg14[%334, %c0_127] : memref<64x512xf32, #tpu.memory_space<vmem>>, vector<8x512xf32>
    %336 = arith.truncf %332 : vector<8x128xf32> to vector<8x128xbf16>
    %cst_128 = arith.constant dense<0.000000e+00> : vector<8x512xf32>
    %337 = tpu.matmul %336, %13, %cst_128 {dimension_numbers = #tpu.dot_dimension_numbers<[1], [0], [0], [1], [0, 0, 1, 1], [], []>} : vector<8x128xbf16>, vector<128x512xbf16>, vector<8x512xf32> -> vector<8x512xf32>
    %338 = arith.addf %335, %337 : vector<8x512xf32>
    %339 = vector.extract_strided_slice %338 {offsets = [0, 0], sizes = [8, 384], strides = [1, 1]} : vector<8x512xf32> to vector<8x384xf32>
    %340 = arith.negf %339 : vector<8x384xf32>
    %341 = math.exp %340 : vector<8x384xf32>
    %cst_129 = arith.constant 1.000000e+00 : f32
    %342 = vector.broadcast %cst_129 : f32 to vector<8x384xf32>
    %343 = arith.addf %342, %341 : vector<8x384xf32>
    %344 = arith.divf %342, %343 : vector<8x384xf32>
    %345 = vector.extract_strided_slice %344 {offsets = [0, 0], sizes = [8, 128], strides = [1, 1]} : vector<8x384xf32> to vector<8x128xf32>
    %346 = vector.extract_strided_slice %344 {offsets = [0, 128], sizes = [8, 128], strides = [1, 1]} : vector<8x384xf32> to vector<8x128xf32>
    %347 = vector.extract_strided_slice %344 {offsets = [0, 256], sizes = [8, 128], strides = [1, 1]} : vector<8x384xf32> to vector<8x128xf32>
    %348 = vector.extract_strided_slice %338 {offsets = [0, 384], sizes = [8, 128], strides = [1, 1]} : vector<8x512xf32> to vector<8x128xf32>
    %349 = math.tanh %348 : vector<8x128xf32>
    %350 = arith.mulf %346, %333 : vector<8x128xf32>
    %351 = arith.mulf %345, %349 : vector<8x128xf32>
    %352 = arith.addf %350, %351 : vector<8x128xf32>
    %353 = math.tanh %352 : vector<8x128xf32>
    %354 = arith.mulf %347, %353 : vector<8x128xf32>
    %355 = vector.broadcast %c7_i32 : i32 to vector<8x1xi32>
    %356 = arith.cmpi slt, %355, %14 : vector<8x1xi32>
    %357 = vector.shape_cast %356 : vector<8x1xi1> to vector<8x1xi1>
    %358 = vector.broadcast %357 : vector<8x1xi1> to vector<8x128xi1>
    %359 = arith.select %358, %354, %332 : vector<8x128xi1>, vector<8x128xf32>
    %c0_130 = arith.constant 0 : index
    %c0_131 = arith.constant 0 : index
    %360 = vector.load %arg12[%c0_130, %c0_131] : memref<8x128xf32, #tpu.memory_space<vmem>>, vector<8x128xf32>
    tpu.vector_store %arg12[%c0_130, %c0_131], %359 {strides = array<i32>} : memref<8x128xf32, #tpu.memory_space<vmem>>, vector<8x128xf32>,
    %361 = vector.shape_cast %356 : vector<8x1xi1> to vector<8x1xi1>
    %362 = vector.broadcast %361 : vector<8x1xi1> to vector<8x128xi1>
    %363 = arith.select %362, %352, %333 : vector<8x128xi1>, vector<8x128xf32>
    %c0_132 = arith.constant 0 : index
    %c0_133 = arith.constant 0 : index
    %364 = vector.load %arg13[%c0_132, %c0_133] : memref<8x128xf32, #tpu.memory_space<vmem>>, vector<8x128xf32>
    tpu.vector_store %arg13[%c0_132, %c0_133], %363 {strides = array<i32>} : memref<8x128xf32, #tpu.memory_space<vmem>>, vector<8x128xf32>,
    %cst_134 = arith.constant 0.000000e+00 : f32
    %365 = vector.shape_cast %356 : vector<8x1xi1> to vector<8x1xi1>
    %366 = vector.broadcast %365 : vector<8x1xi1> to vector<8x128xi1>
    %367 = vector.broadcast %cst_134 : f32 to vector<8x128xf32>
    %368 = arith.select %366, %354, %367 : vector<8x128xi1>, vector<8x128xf32>
    %369 = arith.index_cast %331 : i32 to index
    %c0_135 = arith.constant 0 : index
    %370 = vector.load %arg15[%369, %c0_135] : memref<64x128xf32, #tpu.memory_space<vmem>>, vector<8x128xf32>
    tpu.vector_store %arg15[%369, %c0_135], %368 {strides = array<i32>} : memref<64x128xf32, #tpu.memory_space<vmem>>, vector<8x128xf32>,
    %371 = arith.extui %356 : vector<8x1xi1> to vector<8x1xi32>
    %372 = arith.sitofp %371 : vector<8x1xi32> to vector<8x1xf32>
    %373 = arith.index_cast %331 : i32 to index
    %c0_136 = arith.constant 0 : index
    %374 = vector.load %arg16[%373, %c0_136] : memref<64x1xf32, #tpu.memory_space<vmem>>, vector<8x1xf32>
    tpu.vector_store %arg16[%373, %c0_136], %372 {strides = array<i32>} : memref<64x1xf32, #tpu.memory_space<vmem>>, vector<8x1xf32>,
    %c8_i32_137 = arith.constant 8 : i32
    %c0_138 = arith.constant 0 : index
    %c0_139 = arith.constant 0 : index
    %375 = vector.load %arg15[%c0_138, %c0_139] : memref<64x128xf32, #tpu.memory_space<vmem>>, vector<64x128xf32>
    %376 = arith.truncf %375 : vector<64x128xf32> to vector<64x128xbf16>
    %c0_140 = arith.constant 0 : index
    %c0_141 = arith.constant 0 : index
    %377 = vector.load %arg7[%c0_140, %c0_141] : memref<128x128xbf16, #tpu.memory_space<vmem>>, vector<128x128xbf16>
    %cst_142 = arith.constant dense<0.000000e+00> : vector<64x128xf32>
    %378 = tpu.matmul %376, %377, %cst_142 {dimension_numbers = #tpu.dot_dimension_numbers<[1], [0], [0], [1], [0, 0, 1, 1], [], []>} : vector<64x128xbf16>, vector<128x128xbf16>, vector<64x128xf32> -> vector<64x128xf32>
    %c0_143 = arith.constant 0 : index
    %c0_144 = arith.constant 0 : index
    %379 = vector.load %arg8[%c0_143, %c0_144] : memref<1x128xf32, #tpu.memory_space<vmem>>, vector<1x128xf32>
    %380 = vector.broadcast %379 : vector<1x128xf32> to vector<64x128xf32>
    %381 = arith.addf %378, %380 : vector<64x128xf32>
    %382 = vector.shape_cast %381 : vector<64x128xf32> to vector<8x8x128xf32>
    %c0_145 = arith.constant 0 : index
    %c0_146 = arith.constant 0 : index
    %c0_147 = arith.constant 0 : index
    %383 = vector.load %arg9[%c0_145, %c0_146, %c0_147] : memref<8x8x128xf32, #tpu.memory_space<vmem>>, vector<8x8x128xf32>
    tpu.vector_store %arg9[%c0_145, %c0_146, %c0_147], %382 {strides = array<i32>} : memref<8x8x128xf32, #tpu.memory_space<vmem>>, vector<8x8x128xf32>,
    %384 = tpu.iota {dimensions = array<i32: 1>} : vector<64x128xi32>
    %c8_i32_148 = arith.constant 8 : i32
    %385 = vector.broadcast %c8_i32_148 : i32 to vector<64x128xi32>
    %386 = arith.cmpi slt, %384, %385 : vector<64x128xi32>
    %cst_149 = arith.constant -1.000000e+30 : f32
    %387 = vector.broadcast %cst_149 : f32 to vector<64x128xf32>
    %388 = arith.select %386, %381, %387 : vector<64x128xi1>, vector<64x128xf32>
    %cst_150 = arith.constant dense<0xFF800000> : vector<64xf32>
    %389 = vector.multi_reduction <maximumf>, %388, %cst_150 [1] : vector<64x128xf32> to vector<64xf32>
    %390 = vector.shape_cast %389 : vector<64xf32> to vector<64x1xf32>
    %391 = vector.broadcast %390 : vector<64x1xf32> to vector<64x128xf32>
    %392 = arith.subf %388, %391 : vector<64x128xf32>
    %393 = math.exp %392 : vector<64x128xf32>
    %cst_151 = arith.constant dense<0.000000e+00> : vector<64xf32>
    %394 = vector.multi_reduction <add>, %393, %cst_151 [1] : vector<64x128xf32> to vector<64xf32>
    %395 = vector.shape_cast %394 : vector<64xf32> to vector<64x1xf32>
    %396 = math.log %395 : vector<64x1xf32>
    %397 = vector.broadcast %396 : vector<64x1xf32> to vector<64x128xf32>
    %398 = arith.subf %392, %397 : vector<64x128xf32>
    %c0_152 = arith.constant 0 : index
    %c0_153 = arith.constant 0 : index
    %c0_154 = arith.constant 0 : index
    %399 = vector.load %arg3[%c0_152, %c0_153, %c0_154] : memref<8x8x1xi32, #tpu.memory_space<vmem>>, vector<8x8x1xi32>
    %400 = vector.shape_cast %399 : vector<8x8x1xi32> to vector<64x1xi32>
    %401 = vector.broadcast %400 : vector<64x1xi32> to vector<64x128xi32>
    %402 = arith.cmpi eq, %384, %401 : vector<64x128xi32>
    %403 = arith.extui %402 : vector<64x128xi1> to vector<64x128xi32>
    %404 = arith.sitofp %403 : vector<64x128xi32> to vector<64x128xf32>
    %405 = arith.mulf %398, %404 : vector<64x128xf32>
    %cst_155 = arith.constant dense<0.000000e+00> : vector<64xf32>
    %406 = vector.multi_reduction <add>, %405, %cst_155 [1] : vector<64x128xf32> to vector<64xf32>
    %407 = vector.shape_cast %406 : vector<64xf32> to vector<64x1xf32>
    %cst_156 = arith.constant 0.000000e+00 : f32
    %408 = vector.broadcast %cst_156 : f32 to vector<64x1xf32>
    %409 = arith.subf %408, %407 : vector<64x1xf32>
    %c0_157 = arith.constant 0 : index
    %c0_158 = arith.constant 0 : index
    %410 = vector.load %arg16[%c0_157, %c0_158] : memref<64x1xf32, #tpu.memory_space<vmem>>, vector<64x1xf32>
    %411 = arith.mulf %409, %410 : vector<64x1xf32>
    %412 = vector.shape_cast %411 : vector<64x1xf32> to vector<1x64x1xf32>
    %cst_159 = arith.constant dense<0.000000e+00> : vector<1xf32>
    %413 = vector.multi_reduction <add>, %412, %cst_159 [1, 2] : vector<1x64x1xf32> to vector<1xf32>
    %414 = vector.shape_cast %413 : vector<1xf32> to vector<1x1x1xf32>
    %415 = vector.extract %414[0, 0, 0] : f32 from vector<1x1x1xf32>
    %416 = vector.broadcast %415 : f32 to vector<1x1xf32>
    %417 = vector.shape_cast %410 : vector<64x1xf32> to vector<1x64x1xf32>
    %cst_160 = arith.constant dense<0.000000e+00> : vector<1xf32>
    %418 = vector.multi_reduction <add>, %417, %cst_160 [1, 2] : vector<1x64x1xf32> to vector<1xf32>
    %419 = vector.shape_cast %418 : vector<1xf32> to vector<1x1x1xf32>
    %420 = vector.extract %419[0, 0, 0] : f32 from vector<1x1x1xf32>
    %421 = vector.broadcast %420 : f32 to vector<1x1xf32>
    %422 = vector.shape_cast %416 : vector<1x1xf32> to vector<1x1xf32>
    %423 = vector.broadcast %422 : vector<1x1xf32> to vector<8x128xf32>
    %c0_161 = arith.constant 0 : index
    %c0_162 = arith.constant 0 : index
    %424 = vector.load %arg10[%c0_161, %c0_162] : memref<8x128xf32, #tpu.memory_space<vmem>>, vector<8x128xf32>
    tpu.vector_store %arg10[%c0_161, %c0_162], %423 {strides = array<i32>} : memref<8x128xf32, #tpu.memory_space<vmem>>, vector<8x128xf32>,
    %425 = vector.shape_cast %421 : vector<1x1xf32> to vector<1x1xf32>
    %426 = vector.broadcast %425 : vector<1x1xf32> to vector<8x128xf32>
    %c0_163 = arith.constant 0 : index
    %c0_164 = arith.constant 0 : index
    %427 = vector.load %arg11[%c0_163, %c0_164] : memref<8x128xf32, #tpu.memory_space<vmem>>, vector<8x128xf32>
    tpu.vector_store %arg11[%c0_163, %c0_164], %426 {strides = array<i32>} : memref<8x128xf32, #tpu.memory_space<vmem>>, vector<8x128xf32>,
    return
  }
  func.func @transform_0(%arg0: i32) -> (i32, i32, i32) {
    %c0_i32 = arith.constant 0 : i32
    %c0_i32_0 = arith.constant 0 : i32
    %c0_i32_1 = arith.constant 0 : i32
    return %c0_i32, %arg0, %c0_i32_0 : i32, i32, i32
  }
  func.func @transform_1(%arg0: i32) -> (i32, i32) {
    %c0_i32 = arith.constant 0 : i32
    %c0_i32_0 = arith.constant 0 : i32
    return %arg0, %c0_i32 : i32, i32
  }
  func.func @transform_2(%arg0: i32) -> (i32, i32, i32) {
    %c0_i32 = arith.constant 0 : i32
    %c0_i32_0 = arith.constant 0 : i32
    %c0_i32_1 = arith.constant 0 : i32
    return %c0_i32, %arg0, %c0_i32_0 : i32, i32, i32
  }
  func.func @transform_3(%arg0: i32) -> (i32, i32) {
    %c0_i32 = arith.constant 0 : i32
    %c0_i32_0 = arith.constant 0 : i32
    %c0_i32_1 = arith.constant 0 : i32
    return %c0_i32, %c0_i32_0 : i32, i32
  }
  func.func @transform_4(%arg0: i32) -> (i32, i32) {
    %c0_i32 = arith.constant 0 : i32
    %c0_i32_0 = arith.constant 0 : i32
    %c0_i32_1 = arith.constant 0 : i32
    return %c0_i32, %c0_i32_0 : i32, i32
  }
  func.func @transform_5(%arg0: i32) -> (i32, i32) {
    %c0_i32 = arith.constant 0 : i32
    %c0_i32_0 = arith.constant 0 : i32
    %c0_i32_1 = arith.constant 0 : i32
    return %c0_i32, %c0_i32_0 : i32, i32
  }
  func.func @transform_6(%arg0: i32) -> (i32, i32) {
    %c0_i32 = arith.constant 0 : i32
    %c0_i32_0 = arith.constant 0 : i32
    %c0_i32_1 = arith.constant 0 : i32
    return %c0_i32, %c0_i32_0 : i32, i32
  }
  func.func @transform_7(%arg0: i32) -> (i32, i32) {
    %c0_i32 = arith.constant 0 : i32
    %c0_i32_0 = arith.constant 0 : i32
    %c0_i32_1 = arith.constant 0 : i32
    return %c0_i32, %c0_i32_0 : i32, i32
  }
  func.func @transform_8(%arg0: i32) -> (i32, i32, i32) {
    %c0_i32 = arith.constant 0 : i32
    %c0_i32_0 = arith.constant 0 : i32
    %c0_i32_1 = arith.constant 0 : i32
    return %c0_i32, %arg0, %c0_i32_0 : i32, i32, i32
  }
  func.func @transform_9(%arg0: i32) -> (i32, i32) {
    %c0_i32 = arith.constant 0 : i32
    %c0_i32_0 = arith.constant 0 : i32
    return %arg0, %c0_i32 : i32, i32
  }
  func.func @transform_10(%arg0: i32) -> (i32, i32) {
    %c0_i32 = arith.constant 0 : i32
    %c0_i32_0 = arith.constant 0 : i32
    return %arg0, %c0_i32 : i32, i32
  }
}

</mosaic_0001>

<llo_original>
// kernel: neg.1
$region0: #{neg.1}
  #allocation0 [shape = 's32[1]{0}', space=sflag, size = 0x4, scoped, tag = 'scoped memory for neg.1']
  %s0 = inlined_call_operand.vmem [shape: s32[2], index: 0, kind: input, shape index: {}]
  %s1 = inlined_call_operand.vmem [shape: s32[2], index: 1, kind: output, shape index: {}]
  %v2 = vld [vmem:[%s0] sm:$0x1]
  %3 = xla_tuple %v2
  %4 = xla_tuple %3
  %v5 = vsub.s32 0, %v2
  %6 = xla_tuple %v5
  %7 = vst [vmem:[%s1] sm:$0x1] %v5

// kernel: sequence_labeling_forward.1
$region0: #{sequence_labeling_forward.1}
  #allocation0 [shape = 'u32[]', space=smem, size = 0x4, offset = 0x4, fixed_abs, tag = 'smem constant byte address 0x4 - core index']
  #allocation1 [shape = 'u32[72,128]{1,0:T(1,128)}', space=vmem, size = 0x9000, scoped, tag = 'internal scratch']
  #allocation2 [shape = 'f32[8,128]{1,0:T(8,128)}', space=vmem, size = 0x1000, scoped, tag = 'scratch operand']
  #allocation3 [shape = 'f32[8,128]{1,0:T(8,128)}', space=vmem, size = 0x1000, scoped, tag = 'scratch operand']
  #allocation4 [shape = 'f32[64,512]{1,0:T(8,128)}', space=vmem, size = 0x20000, scoped, tag = 'scratch operand']
  #allocation5 [shape = 'f32[64,128]{1,0:T(8,128)}', space=vmem, size = 0x8000, scoped, tag = 'scratch operand']
  #allocation6 [shape = 'f32[64,1]{1,0:T(8,128)}', space=vmem, size = 0x8000, scoped, tag = 'scratch operand']
  %s0 = inlined_call_operand.vmem [shape: f32[8,8,32], index: 0, kind: input, shape index: {}]
  %s1 = inlined_call_operand.vmem [shape: s32[8,1], index: 1, kind: input, shape index: {}]
  %s2 = inlined_call_operand.vmem [shape: s32[8,8,1], index: 2, kind: input, shape index: {}]
  %s3 = inlined_call_operand.vmem [shape: bf16[32,512], index: 3, kind: input, shape index: {}]
  %s4 = inlined_call_operand.vmem [shape: bf16[128,512], index: 4, kind: input, shape index: {}]
  %s5 = inlined_call_operand.vmem [shape: f32[1,512], index: 5, kind: input, shape index: {}]
  %s6 = inlined_call_operand.vmem [shape: bf16[128,128], index: 6, kind: input, shape index: {}]
  %s7 = inlined_call_operand.vmem [shape: f32[1,128], index: 7, kind: input, shape index: {}]
  %s8 = inlined_call_operand.vmem [shape: f32[8,8,128], index: 8, kind: output, shape index: {0}]
  %s9 = inlined_call_operand.vmem [shape: f32[8,128], index: 9, kind: output, shape index: {1}]
  %s10 = inlined_call_operand.vmem [shape: f32[8,128], index: 10, kind: output, shape index: {2}]
  %11 = xla_tuple %s8, %s9, %s10
  %s12 = sld [smem:[#allocation0]]
  $region58: #{sequence_labeling_forward.1} parent=0
    _
  %s14 = ssub.s32 1, %s12
  %s15 = scalar_select 0, %s14, %s12
  // Predicated region
  $region2: #{sequence_labeling_forward.1} parent=0 // pred_check
    _
  $region3: #{sequence_labeling_forward.1} parent=0 // pred_check_branch
    %17 = sbr.rel (0) target = $region5
  $region4: #{sequence_labeling_forward.1} parent=0 // pred_region
    _
  $region5: #{sequence_labeling_forward.1} parent=0 // pred_fallthru
    _
  // Predicated region
  $region6: #{sequence_labeling_forward.1} parent=0 // pred_check
    _
  $region7: #{sequence_labeling_forward.1} parent=0 // pred_check_branch
    %19 = sbr.rel (0) target = $region9
  $region8: #{sequence_labeling_forward.1} parent=0 // pred_region
    _
  $region9: #{sequence_labeling_forward.1} parent=0 // pred_fallthru
    _
  // Predicated region
  $region10: #{sequence_labeling_forward.1} parent=0 // pred_check
    _
  $region11: #{sequence_labeling_forward.1} parent=0 // pred_check_branch
    %21 = sbr.rel (0) target = $region13
  $region12: #{sequence_labeling_forward.1} parent=0 // pred_region
    _
  $region13: #{sequence_labeling_forward.1} parent=0 // pred_fallthru
    _
  // Predicated region
  $region14: #{sequence_labeling_forward.1} parent=0 // pred_check
    _
  $region15: #{sequence_labeling_forward.1} parent=0 // pred_check_branch
    %23 = sbr.rel (0) target = $region17
  $region16: #{sequence_labeling_forward.1} parent=0 // pred_region
    _
  $region17: #{sequence_labeling_forward.1} parent=0 // pred_fallthru
    _
  // Predicated region
  $region18: #{sequence_labeling_forward.1} parent=0 // pred_check
    _
  $region19: #{sequence_labeling_forward.1} parent=0 // pred_check_branch
    %25 = sbr.rel (0) target = $region21
  $region20: #{sequence_labeling_forward.1} parent=0 // pred_region
    _
  $region21: #{sequence_labeling_forward.1} parent=0 // pred_fallthru
    _
  // Predicated region
  $region22: #{sequence_labeling_forward.1} parent=0 // pred_check
    _
  $region23: #{sequence_labeling_forward.1} parent=0 // pred_check_branch
    %27 = sbr.rel (0) target = $region25
  $region24: #{sequence_labeling_forward.1} parent=0 // pred_region
    _
  $region25: #{sequence_labeling_forward.1} parent=0 // pred_fallthru
    _
  // Predicated region
  $region26: #{sequence_labeling_forward.1} parent=0 // pred_check
    _
  $region27: #{sequence_labeling_forward.1} parent=0 // pred_check_branch
    %29 = sbr.rel (0) target = $region29
  $region28: #{sequence_labeling_forward.1} parent=0 // pred_region
    _
  $region29: #{sequence_labeling_forward.1} parent=0 // pred_fallthru
    _
  // Predicated region
  $region30: #{sequence_labeling_forward.1} parent=0 // pred_check
    _
  $region31: #{sequence_labeling_forward.1} parent=0 // pred_check_branch
    %31 = sbr.rel (0) target = $region33
  $region32: #{sequence_labeling_forward.1} parent=0 // pred_region
    _
  $region33: #{sequence_labeling_forward.1} parent=0 // pred_fallthru
    _
  %v33 = vld [vmem:[%s0] sm:$0xff]
  %v34 = vld [vmem:[%s0 + $0x8] sm:$0xff]
  %v35 = vld [vmem:[%s0 + $0x10] sm:$0xff]
  %v36 = vld [vmem:[%s0 + $0x18] sm:$0xff]
  %v37 = vld [vmem:[%s0 + $0x20] sm:$0xff]
  %v38 = vld [vmem:[%s0 + $0x28] sm:$0xff]
  %v39 = vld [vmem:[%s0 + $0x30] sm:$0xff]
  %v40 = vld [vmem:[%s0 + $0x38] sm:$0xff]
  %v41 = vpack.c.bf16 %v34, %v33
  %v42 = vpack.c.bf16 %v36, %v35
  %v43 = vpack.c.bf16 %v38, %v37
  %v44 = vpack.c.bf16 %v40, %v39
  %v45 = vld [vmem:[%s3] sm:$0xff]
  %v46 = vld [vmem:[%s3 + $0x8] sm:$0xff]
  %v47 = vld [vmem:[%s3 + $0x10] sm:$0xff]
  %v48 = vld [vmem:[%s3 + $0x18] sm:$0xff]
  %v49 = vld [vmem:[%s3 + $0x20] sm:$0xff]
  %v50 = vld [vmem:[%s3 + $0x28] sm:$0xff]
  %v51 = vld [vmem:[%s3 + $0x30] sm:$0xff]
  %v52 = vld [vmem:[%s3 + $0x38] sm:$0xff]
  %v53 = vld [vmem:[%s5] sm:$0xf]
  %v55 = vperm.slane %v53, 0
  %v56 = vperm.slane %v53, 1
  %v57 = vperm.slane %v53, 2
  %v58 = vperm.slane %v53, 3
  %v71 = vunpack.c.l.b16 %v45
  %v72 = vunpack.c.h.b16 %v45
  %v73 = vunpack.c.l.b16 %v46
  %v74 = vunpack.c.h.b16 %v46
  %v75 = vunpack.c.l.b16 %v47
  %v76 = vunpack.c.h.b16 %v47
  %v77 = vunpack.c.l.b16 %v48
  %v78 = vunpack.c.h.b16 %v48
  %v79 = vunpack.c.l.b16 %v49
  %v80 = vunpack.c.h.b16 %v49
  %v81 = vunpack.c.l.b16 %v50
  %v82 = vunpack.c.h.b16 %v50
  %v83 = vunpack.c.l.b16 %v51
  %v84 = vunpack.c.h.b16 %v51
  %v85 = vunpack.c.l.b16 %v52
  %v86 = vunpack.c.h.b16 %v52
  %v87 = vpack.c.b16 %v75, %v71
  %v88 = vpack.c.b16 %v76, %v72
  %v89 = vpack.c.b16 %v77, %v73
  %v90 = vpack.c.b16 %v78, %v74
  %v91 = vpack.c.b16 %v83, %v79
  %v92 = vpack.c.b16 %v84, %v80
  %v93 = vpack.c.b16 %v85, %v81
  %v94 = vpack.c.b16 %v86, %v82
  %vm103 = vcmask 261120
  %v105 = vsel %vm103, %v41, 0
  %v108 = vsel %vm103, %v42, 0
  %v111 = vsel %vm103, %v43, 0
  %v114 = vsel %vm103, %v44, 0
  %116 = vmatpush.bf16.msra.mxu0 0
  %117 = vmatpush.bf16.msra.mxu0 0
  %118 = vmatpush.bf16.msra.mxu0 0
  %119 = vmatpush.bf16.msra.mxu0 0
  %120 = vmatpush.bf16.msra.mxu0 0
  %121 = vmatpush.bf16.msra.mxu0 0
  %122 = vmatpush.bf16.msra.mxu0 %v91
  %123 = vmatpush.bf16.msra.mxu0 %v87
  %124 = vmatmul.bf16.gmra.mxu0 %v105
  %v125 = vpop.f32.mrf.mxu0
  %v126 = vadd.f32 %v55, %v125
  %v127 = vpop.f32.mrf.mxu0
  %v128 = vadd.f32 %v55, %v127
  %129 = vmatmul.bf16.gmra.mxu0 %v108
  %v130 = vpop.f32.mrf.mxu0
  %v131 = vadd.f32 %v55, %v130
  %v132 = vpop.f32.mrf.mxu0
  %v133 = vadd.f32 %v55, %v132
  %134 = vmatmul.bf16.gmra.mxu0 %v111
  %v135 = vpop.f32.mrf.mxu0
  %v136 = vadd.f32 %v55, %v135
  %v137 = vpop.f32.mrf.mxu0
  %v138 = vadd.f32 %v55, %v137
  %139 = vmatmul.bf16.gmra.mxu0 %v114
  %v140 = vpop.f32.mrf.mxu0
  %v141 = vadd.f32 %v55, %v140
  %v142 = vpop.f32.mrf.mxu0
  %v143 = vadd.f32 %v55, %v142
  %144 = vdwg.mxu0
  %145 = vmatpush.bf16.msra.mxu0 0
  %146 = vmatpush.bf16.msra.mxu0 0
  %147 = vmatpush.bf16.msra.mxu0 0
  %148 = vmatpush.bf16.msra.mxu0 0
  %149 = vmatpush.bf16.msra.mxu0 0
  %150 = vmatpush.bf16.msra.mxu0 0
  %151 = vmatpush.bf16.msra.mxu0 %v92
  %152 = vmatpush.bf16.msra.mxu0 %v88
  %153 = vmatmul.bf16.gmra.mxu0 %v105
  %v154 = vpop.f32.mrf.mxu0
  %v155 = vadd.f32 %v56, %v154
  %v156 = vpop.f32.mrf.mxu0
  %v157 = vadd.f32 %v56, %v156
  %158 = vmatmul.bf16.gmra.mxu0 %v108
  %v159 = vpop.f32.mrf.mxu0
  %v160 = vadd.f32 %v56, %v159
  %v161 = vpop.f32.mrf.mxu0
  %v162 = vadd.f32 %v56, %v161
  %163 = vmatmul.bf16.gmra.mxu0 %v111
  %v164 = vpop.f32.mrf.mxu0
  %v165 = vadd.f32 %v56, %v164
  %v166 = vpop.f32.mrf.mxu0
  %v167 = vadd.f32 %v56, %v166
  %168 = vmatmul.bf16.gmra.mxu0 %v114
  %v169 = vpop.f32.mrf.mxu0
  %v170 = vadd.f32 %v56, %v169
  %v171 = vpop.f32.mrf.mxu0
  %v172 = vadd.f32 %v56, %v171
  %173 = vdwg.mxu0
  %174 = vmatpush.bf16.msra.mxu0 0
  %175 = vmatpush.bf16.msra.mxu0 0
  %176 = vmatpush.bf16.msra.mxu0 0
  %177 = vmatpush.bf16.msra.mxu0 0
  %178 = vmatpush.bf16.msra.mxu0 0
  %179 = vmatpush.bf16.msra.mxu0 0
  %180 = vmatpush.bf16.msra.mxu0 %v93
  %181 = vmatpush.bf16.msra.mxu0 %v89
  %182 = vmatmul.bf16.gmra.mxu0 %v105
  %v183 = vpop.f32.mrf.mxu0
  %v184 = vadd.f32 %v57, %v183
  %v185 = vpop.f32.mrf.mxu0
  %v186 = vadd.f32 %v57, %v185
  %187 = vmatmul.bf16.gmra.mxu0 %v108
  %v188 = vpop.f32.mrf.mxu0
  %v189 = vadd.f32 %v57, %v188
  %v190 = vpop.f32.mrf.mxu0
  %v191 = vadd.f32 %v57, %v190
  %192 = vmatmul.bf16.gmra.mxu0 %v111
  %v193 = vpop.f32.mrf.mxu0
  %v194 = vadd.f32 %v57, %v193
  %v195 = vpop.f32.mrf.mxu0
  %v196 = vadd.f32 %v57, %v195
  %197 = vmatmul.bf16.gmra.mxu0 %v114
  %v198 = vpop.f32.mrf.mxu0
  %v199 = vadd.f32 %v57, %v198
  %v200 = vpop.f32.mrf.mxu0
  %v201 = vadd.f32 %v57, %v200
  %202 = vdwg.mxu0
  %203 = vmatpush.bf16.msra.mxu0 0
  %204 = vmatpush.bf16.msra.mxu0 0
  %205 = vmatpush.bf16.msra.mxu0 0
  %206 = vmatpush.bf16.msra.mxu0 0
  %207 = vmatpush.bf16.msra.mxu0 0
  %208 = vmatpush.bf16.msra.mxu0 0
  %209 = vmatpush.bf16.msra.mxu0 %v94
  %210 = vmatpush.bf16.msra.mxu0 %v90
  %211 = vmatmul.bf16.gmra.mxu0 %v105
  %v212 = vpop.f32.mrf.mxu0
  %v213 = vadd.f32 %v58, %v212
  %v214 = vpop.f32.mrf.mxu0
  %v215 = vadd.f32 %v58, %v214
  %216 = vmatmul.bf16.gmra.mxu0 %v108
  %v217 = vpop.f32.mrf.mxu0
  %v218 = vadd.f32 %v58, %v217
  %v219 = vpop.f32.mrf.mxu0
  %v220 = vadd.f32 %v58, %v219
  %221 = vmatmul.bf16.gmra.mxu0 %v111
  %v222 = vpop.f32.mrf.mxu0
  %v223 = vadd.f32 %v58, %v222
  %v224 = vpop.f32.mrf.mxu0
  %v225 = vadd.f32 %v58, %v224
  %226 = vmatmul.bf16.gmra.mxu0 %v114
  %v227 = vpop.f32.mrf.mxu0
  %v228 = vadd.f32 %v58, %v227
  %v229 = vpop.f32.mrf.mxu0
  %v230 = vadd.f32 %v58, %v229
  %231 = vdwg.mxu0
  %232 = vst [vmem:[#allocation4] sm:$0xff] %v126
  %233 = vst [vmem:[#allocation4 + $0x8] sm:$0xff] %v155
  %234 = vst [vmem:[#allocation4 + $0x10] sm:$0xff] %v184
  %235 = vst [vmem:[#allocation4 + $0x18] sm:$0xff] %v213
  %236 = vst [vmem:[#allocation4 + $0x20] sm:$0xff] %v128
  %237 = vst [vmem:[#allocation4 + $0x28] sm:$0xff] %v157
  %238 = vst [vmem:[#allocation4 + $0x30] sm:$0xff] %v186
  %239 = vst [vmem:[#allocation4 + $0x38] sm:$0xff] %v215
  %240 = vst [vmem:[#allocation4 + $0x40] sm:$0xff] %v131
  %241 = vst [vmem:[#allocation4 + $0x48] sm:$0xff] %v160
  %242 = vst [vmem:[#allocation4 + $0x50] sm:$0xff] %v189
  %243 = vst [vmem:[#allocation4 + $0x58] sm:$0xff] %v218
  %244 = vst [vmem:[#allocation4 + $0x60] sm:$0xff] %v133
  %245 = vst [vmem:[#allocation4 + $0x68] sm:$0xff] %v162
  %246 = vst [vmem:[#allocation4 + $0x70] sm:$0xff] %v191
  %247 = vst [vmem:[#allocation4 + $0x78] sm:$0xff] %v220
  %248 = vst [vmem:[#allocation4 + $0x80] sm:$0xff] %v136
  %249 = vst [vmem:[#allocation4 + $0x88] sm:$0xff] %v165
  %250 = vst [vmem:[#allocation4 + $0x90] sm:$0xff] %v194
  %251 = vst [vmem:[#allocation4 + $0x98] sm:$0xff] %v223
  %252 = vst [vmem:[#allocation4 + $0xa0] sm:$0xff] %v138
  %253 = vst [vmem:[#allocation4 + $0xa8] sm:$0xff] %v167
  %254 = vst [vmem:[#allocation4 + $0xb0] sm:$0xff] %v196
  %255 = vst [vmem:[#allocation4 + $0xb8] sm:$0xff] %v225
  %256 = vst [vmem:[#allocation4 + $0xc0] sm:$0xff] %v141
  %257 = vst [vmem:[#allocation4 + $0xc8] sm:$0xff] %v170
  %258 = vst [vmem:[#allocation4 + $0xd0] sm:$0xff] %v199
  %259 = vst [vmem:[#allocation4 + $0xd8] sm:$0xff] %v228
  %260 = vst [vmem:[#allocation4 + $0xe0] sm:$0xff] %v143
  %261 = vst [vmem:[#allocation4 + $0xe8] sm:$0xff] %v172
  %262 = vst [vmem:[#allocation4 + $0xf0] sm:$0xff] %v201
  %263 = vst [vmem:[#allocation4 + $0xf8] sm:$0xff] %v230
  %264 = vst [vmem:[#allocation2] sm:$0xff] 0.0
  %265 = vst [vmem:[#allocation3] sm:$0xff] 0.0
  %v266 = vld [vmem:[%s4] sm:$0xff]
  %v267 = vld [vmem:[%s4 + $0x8] sm:$0xff]
  %v268 = vld [vmem:[%s4 + $0x10] sm:$0xff]
  %v269 = vld [vmem:[%s4 + $0x18] sm:$0xff]
  %v270 = vld [vmem:[%s4 + $0x20] sm:$0xff]
  %v271 = vld [vmem:[%s4 + $0x28] sm:$0xff]
  %v272 = vld [vmem:[%s4 + $0x30] sm:$0xff]
  %v273 = vld [vmem:[%s4 + $0x38] sm:$0xff]
  %v274 = vld [vmem:[%s4 + $0x40] sm:$0xff]
  %v275 = vld [vmem:[%s4 + $0x48] sm:$0xff]
  %v276 = vld [vmem:[%s4 + $0x50] sm:$0xff]
  %v277 = vld [vmem:[%s4 + $0x58] sm:$0xff]
  %v278 = vld [vmem:[%s4 + $0x60] sm:$0xff]
  %v279 = vld [vmem:[%s4 + $0x68] sm:$0xff]
  %v280 = vld [vmem:[%s4 + $0x70] sm:$0xff]
  %v281 = vld [vmem:[%s4 + $0x78] sm:$0xff]
  %v282 = vld [vmem:[%s4 + $0x80] sm:$0xff]
  %v283 = vld [vmem:[%s4 + $0x88] sm:$0xff]
  %v284 = vld [vmem:[%s4 + $0x90] sm:$0xff]
  %v285 = vld [vmem:[%s4 + $0x98] sm:$0xff]
  %v286 = vld [vmem:[%s4 + $0xa0] sm:$0xff]
  %v287 = vld [vmem:[%s4 + $0xa8] sm:$0xff]
  %v288 = vld [vmem:[%s4 + $0xb0] sm:$0xff]
  %v289 = vld [vmem:[%s4 + $0xb8] sm:$0xff]
  %v290 = vld [vmem:[%s4 + $0xc0] sm:$0xff]
  %v291 = vld [vmem:[%s4 + $0xc8] sm:$0xff]
  %v292 = vld [vmem:[%s4 + $0xd0] sm:$0xff]
  %v293 = vld [vmem:[%s4 + $0xd8] sm:$0xff]
  %v294 = vld [vmem:[%s4 + $0xe0] sm:$0xff]
  %v295 = vld [vmem:[%s4 + $0xe8] sm:$0xff]
  %v296 = vld [vmem:[%s4 + $0xf0] sm:$0xff]
  %v297 = vld [vmem:[%s4 + $0xf8] sm:$0xff]
  %v298 = vld [vmem:[%s1] sm:$0xff]
  %v299 = vld [vmem:[#allocation2] sm:$0xff]
  %v300 = vld [vmem:[#allocation3] sm:$0xff]
  %s301 = smul.u32 0, 4
  %s302 = smul.addr %s301, 8
  %s303 = scalar_lea.vmem [#allocation4], %s302
  %v304 = vld [vmem:[%s303] sm:$0xff]
  %v305 = vld [vmem:[%s303 + $0x8] sm:$0xff]
  %v306 = vld [vmem:[%s303 + $0x10] sm:$0xff]
  %v307 = vld [vmem:[%s303 + $0x18] sm:$0xff]
  %v308 = vpack.c.bf16 %v299, %v299
  %v341 = vunpack.c.l.b16 %v266
  %v342 = vunpack.c.h.b16 %v266
  %v343 = vunpack.c.l.b16 %v267
  %v344 = vunpack.c.h.b16 %v267
  %v345 = vunpack.c.l.b16 %v268
  %v346 = vunpack.c.h.b16 %v268
  %v347 = vunpack.c.l.b16 %v269
  %v348 = vunpack.c.h.b16 %v269
  %v349 = vunpack.c.l.b16 %v270
  %v350 = vunpack.c.h.b16 %v270
  %v351 = vunpack.c.l.b16 %v271
  %v352 = vunpack.c.h.b16 %v271
  %v353 = vunpack.c.l.b16 %v272
  %v354 = vunpack.c.h.b16 %v272
  %v355 = vunpack.c.l.b16 %v273
  %v356 = vunpack.c.h.b16 %v273
  %v357 = vunpack.c.l.b16 %v274
  %v358 = vunpack.c.h.b16 %v274
  %v359 = vunpack.c.l.b16 %v275
  %v360 = vunpack.c.h.b16 %v275
  %v361 = vunpack.c.l.b16 %v276
  %v362 = vunpack.c.h.b16 %v276
  %v363 = vunpack.c.l.b16 %v277
  %v364 = vunpack.c.h.b16 %v277
  %v365 = vunpack.c.l.b16 %v278
  %v366 = vunpack.c.h.b16 %v278
  %v367 = vunpack.c.l.b16 %v279
  %v368 = vunpack.c.h.b16 %v279
  %v369 = vunpack.c.l.b16 %v280
  %v370 = vunpack.c.h.b16 %v280
  %v371 = vunpack.c.l.b16 %v281
  %v372 = vunpack.c.h.b16 %v281
  %v373 = vunpack.c.l.b16 %v282
  %v374 = vunpack.c.h.b16 %v282
  %v375 = vunpack.c.l.b16 %v283
  %v376 = vunpack.c.h.b16 %v283
  %v377 = vunpack.c.l.b16 %v284
  %v378 = vunpack.c.h.b16 %v284
  %v379 = vunpack.c.l.b16 %v285
  %v380 = vunpack.c.h.b16 %v285
  %v381 = vunpack.c.l.b16 %v286
  %v382 = vunpack.c.h.b16 %v286
  %v383 = vunpack.c.l.b16 %v287
  %v384 = vunpack.c.h.b16 %v287
  %v385 = vunpack.c.l.b16 %v288
  %v386 = vunpack.c.h.b16 %v288
  %v387 = vunpack.c.l.b16 %v289
  %v388 = vunpack.c.h.b16 %v289
  %v389 = vunpack.c.l.b16 %v290
  %v390 = vunpack.c.h.b16 %v290
  %v391 = vunpack.c.l.b16 %v291
  %v392 = vunpack.c.h.b16 %v291
  %v393 = vunpack.c.l.b16 %v292
  %v394 = vunpack.c.h.b16 %v292
  %v395 = vunpack.c.l.b16 %v293
  %v396 = vunpack.c.h.b16 %v293
  %v397 = vunpack.c.l.b16 %v294
  %v398 = vunpack.c.h.b16 %v294
  %v399 = vunpack.c.l.b16 %v295
  %v400 = vunpack.c.h.b16 %v295
  %v401 = vunpack.c.l.b16 %v296
  %v402 = vunpack.c.h.b16 %v296
  %v403 = vunpack.c.l.b16 %v297
  %v404 = vunpack.c.h.b16 %v297
  %v405 = vpack.c.b16 %v345, %v341
  %v406 = vpack.c.b16 %v346, %v342
  %v407 = vpack.c.b16 %v347, %v343
  %v408 = vpack.c.b16 %v348, %v344
  %v409 = vpack.c.b16 %v353, %v349
  %v410 = vpack.c.b16 %v354, %v350
  %v411 = vpack.c.b16 %v355, %v351
  %v412 = vpack.c.b16 %v356, %v352
  %v413 = vpack.c.b16 %v361, %v357
  %v414 = vpack.c.b16 %v362, %v358
  %v415 = vpack.c.b16 %v363, %v359
  %v416 = vpack.c.b16 %v364, %v360
  %v417 = vpack.c.b16 %v369, %v365
  %v418 = vpack.c.b16 %v370, %v366
  %v419 = vpack.c.b16 %v371, %v367
  %v420 = vpack.c.b16 %v372, %v368
  %v421 = vpack.c.b16 %v377, %v373
  %v422 = vpack.c.b16 %v378, %v374
  %v423 = vpack.c.b16 %v379, %v375
  %v424 = vpack.c.b16 %v380, %v376
  %v425 = vpack.c.b16 %v385, %v381
  %v426 = vpack.c.b16 %v386, %v382
  %v427 = vpack.c.b16 %v387, %v383
  %v428 = vpack.c.b16 %v388, %v384
  %v429 = vpack.c.b16 %v393, %v389
  %v430 = vpack.c.b16 %v394, %v390
  %v431 = vpack.c.b16 %v395, %v391
  %v432 = vpack.c.b16 %v396, %v392
  %v433 = vpack.c.b16 %v401, %v397
  %v434 = vpack.c.b16 %v402, %v398
  %v435 = vpack.c.b16 %v403, %v399
  %v436 = vpack.c.b16 %v404, %v400
  %469 = vmatpush.bf16.msra.mxu0 %v433
  %470 = vmatpush.bf16.msra.mxu0 %v429
  %471 = vmatpush.bf16.msra.mxu0 %v425
  %472 = vmatpush.bf16.msra.mxu0 %v421
  %473 = vmatpush.bf16.msra.mxu0 %v417
  %474 = vmatpush.bf16.msra.mxu0 %v413
  %475 = vmatpush.bf16.msra.mxu0 %v409
  %476 = vmatpush.bf16.msra.mxu0 %v405
  %477 = vmatmul.bf16.gmra.mxu0 %v308
  %v478 = vpop.f32.mrf.mxu0
  %v479 = vadd.f32 0.0, %v478
  %v480 = vpop.f32.mrf.mxu0
  %481 = vdwg.mxu0
  %482 = vmatpush.bf16.msra.mxu0 %v434
  %483 = vmatpush.bf16.msra.mxu0 %v430
  %484 = vmatpush.bf16.msra.mxu0 %v426
  %485 = vmatpush.bf16.msra.mxu0 %v422
  %486 = vmatpush.bf16.msra.mxu0 %v418
  %487 = vmatpush.bf16.msra.mxu0 %v414
  %488 = vmatpush.bf16.msra.mxu0 %v410
  %489 = vmatpush.bf16.msra.mxu0 %v406
  %490 = vmatmul.bf16.gmra.mxu0 %v308
  %v491 = vpop.f32.mrf.mxu0
  %v492 = vadd.f32 0.0, %v491
  %v493 = vpop.f32.mrf.mxu0
  %494 = vdwg.mxu0
  %495 = vmatpush.bf16.msra.mxu0 %v435
  %496 = vmatpush.bf16.msra.mxu0 %v431
  %497 = vmatpush.bf16.msra.mxu0 %v427
  %498 = vmatpush.bf16.msra.mxu0 %v423
  %499 = vmatpush.bf16.msra.mxu0 %v419
  %500 = vmatpush.bf16.msra.mxu0 %v415
  %501 = vmatpush.bf16.msra.mxu0 %v411
  %502 = vmatpush.bf16.msra.mxu0 %v407
  %503 = vmatmul.bf16.gmra.mxu0 %v308
  %v504 = vpop.f32.mrf.mxu0
  %v505 = vadd.f32 0.0, %v504
  %v506 = vpop.f32.mrf.mxu0
  %507 = vdwg.mxu0
  %508 = vmatpush.bf16.msra.mxu0 %v436
  %509 = vmatpush.bf16.msra.mxu0 %v432
  %510 = vmatpush.bf16.msra.mxu0 %v428
  %511 = vmatpush.bf16.msra.mxu0 %v424
  %512 = vmatpush.bf16.msra.mxu0 %v420
  %513 = vmatpush.bf16.msra.mxu0 %v416
  %514 = vmatpush.bf16.msra.mxu0 %v412
  %515 = vmatpush.bf16.msra.mxu0 %v408
  %516 = vmatmul.bf16.gmra.mxu0 %v308
  %v517 = vpop.f32.mrf.mxu0
  %v518 = vadd.f32 0.0, %v517
  %v519 = vpop.f32.mrf.mxu0
  %520 = vdwg.mxu0
  %v521 = vadd.f32 %v304, %v479
  %v522 = vadd.f32 %v305, %v492
  %v523 = vadd.f32 %v306, %v505
  %v524 = vadd.f32 %v307, %v518
  %v525 = vxor.u32 %v521, 2147483648
  %v526 = vxor.u32 %v522, 2147483648
  %v527 = vxor.u32 %v523, 2147483648
  %v528 = vmul.f32 %v525, 1.442695
  %v529 = vpow.pop %v528
  %v530 = vmul.f32 %v526, 1.442695
  %v531 = vpow.pop %v530
  %v532 = vmul.f32 %v527, 1.442695
  %v533 = vpow.pop %v532
  %v534 = vadd.f32 %v529, 1.0
  %v535 = vadd.f32 %v531, 1.0
  %v536 = vadd.f32 %v533, 1.0
  %v537 = vrcp.pop %v534
  %v538 = vmul.f32 %v534, %v537
  %v539 = vsub.f32 1.0, %v538
  %v540 = vmul.f32 %v537, %v539
  %v541 = vadd.f32 %v537, %v540
  %vm542 = vweird.f32 %v534
  %vm543 = vweird.f32 %v537
  %vm544 = vmor %vm542, %vm543
  %v545 = vsel %vm544, %v537, %v541
  %v546 = vand.u32 2147483647, %v534
  %vm547 = vcmp.eq.f32.partialorder %v546, 8.507059e+37
  %v548 = vand.u32 %v534, 2147483648
  %v549 = vor.u32 1.1754944e-38, %v548
  %v550 = vsel %vm547, %v549, %v545
  %v551 = vmul.f32 1.0, %v550
  %v552 = vrcp.pop %v535
  %v553 = vmul.f32 %v535, %v552
  %v554 = vsub.f32 1.0, %v553
  %v555 = vmul.f32 %v552, %v554
  %v556 = vadd.f32 %v552, %v555
  %vm557 = vweird.f32 %v535
  %vm558 = vweird.f32 %v552
  %vm559 = vmor %vm557, %vm558
  %v560 = vsel %vm559, %v552, %v556
  %v561 = vand.u32 2147483647, %v535
  %vm562 = vcmp.eq.f32.partialorder %v561, 8.507059e+37
  %v563 = vand.u32 %v535, 2147483648
  %v564 = vor.u32 1.1754944e-38, %v563
  %v565 = vsel %vm562, %v564, %v560
  %v566 = vmul.f32 1.0, %v565
  %v567 = vrcp.pop %v536
  %v568 = vmul.f32 %v536, %v567
  %v569 = vsub.f32 1.0, %v568
  %v570 = vmul.f32 %v567, %v569
  %v571 = vadd.f32 %v567, %v570
  %vm572 = vweird.f32 %v536
  %vm573 = vweird.f32 %v567
  %vm574 = vmor %vm572, %vm573
  %v575 = vsel %vm574, %v567, %v571
  %v576 = vand.u32 2147483647, %v536
  %vm577 = vcmp.eq.f32.partialorder %v576, 8.507059e+37
  %v578 = vand.u32 %v536, 2147483648
  %v579 = vor.u32 1.1754944e-38, %v578
  %v580 = vsel %vm577, %v579, %v575
  %v581 = vmul.f32 1.0, %v580
  %v582 = vtanh.pop %v524
  %v583 = vmul.f32 %v566, %v300
  %v584 = vmul.f32 %v551, %v582
  %v585 = vadd.f32 %v583, %v584
  %v586 = vtanh.pop %v585
  %v587 = vmul.f32 %v581, %v586
  %vm588 = vcmp.gt.s32.totalorder %v298, 0
  %v589 = vsel %vm588, 1, 0
  %590 = vset.pattern.permute.xlu0 0
  %591 = vperm.xlu0 %590, %v589
  %v592 = vpop.permute.xlu0 %591
  %vm593 = vcmp.eq.s32.totalorder %v592, 1
  %v594 = vsel %vm593, %v587, %v299
  %595 = vst [vmem:[#allocation2] sm:$0xff] %v594
  %v596 = vsel %vm593, %v585, %v300
  %597 = vst [vmem:[#allocation3] sm:$0xff] %v596
  %v598 = vsel %vm593, %v587, 0.0
  %599 = vst [vmem:[#allocation5] sm:$0xff] %v598
  %v600 = vcvt.s32.f32 %v589
  %vm601 = vcmask 7168
  %602 = vst.msk [vmem:[#allocation6] sm:$0xff] %vm601, %v600
  %v603 = vld [vmem:[#allocation2] sm:$0xff]
  %v604 = vld [vmem:[#allocation3] sm:$0xff]
  %s605 = smul.u32 1, 4
  %s606 = smul.addr %s605, 8
  %s607 = scalar_lea.vmem [#allocation4], %s606
  %v608 = vld [vmem:[%s607] sm:$0xff]
  %v609 = vld [vmem:[%s607 + $0x8] sm:$0xff]
  %v610 = vld [vmem:[%s607 + $0x10] sm:$0xff]
  %v611 = vld [vmem:[%s607 + $0x18] sm:$0xff]
  %v612 = vpack.c.bf16 %v603, %v603
  %613 = vmatpush.bf16.msra.mxu0 %v433
  %614 = vmatpush.bf16.msra.mxu0 %v429
  %615 = vmatpush.bf16.msra.mxu0 %v425
  %616 = vmatpush.bf16.msra.mxu0 %v421
  %617 = vmatpush.bf16.msra.mxu0 %v417
  %618 = vmatpush.bf16.msra.mxu0 %v413
  %619 = vmatpush.bf16.msra.mxu0 %v409
  %620 = vmatpush.bf16.msra.mxu0 %v405
  %621 = vmatmul.bf16.gmra.mxu0 %v612
  %v622 = vpop.f32.mrf.mxu0
  %v623 = vadd.f32 0.0, %v622
  %v624 = vpop.f32.mrf.mxu0
  %625 = vdwg.mxu0
  %626 = vmatpush.bf16.msra.mxu0 %v434
  %627 = vmatpush.bf16.msra.mxu0 %v430
  %628 = vmatpush.bf16.msra.mxu0 %v426
  %629 = vmatpush.bf16.msra.mxu0 %v422
  %630 = vmatpush.bf16.msra.mxu0 %v418
  %631 = vmatpush.bf16.msra.mxu0 %v414
  %632 = vmatpush.bf16.msra.mxu0 %v410
  %633 = vmatpush.bf16.msra.mxu0 %v406
  %634 = vmatmul.bf16.gmra.mxu0 %v612
  %v635 = vpop.f32.mrf.mxu0
  %v636 = vadd.f32 0.0, %v635
  %v637 = vpop.f32.mrf.mxu0
  %638 = vdwg.mxu0
  %639 = vmatpush.bf16.msra.mxu0 %v435
  %640 = vmatpush.bf16.msra.mxu0 %v431
  %641 = vmatpush.bf16.msra.mxu0 %v427
  %642 = vmatpush.bf16.msra.mxu0 %v423
  %643 = vmatpush.bf16.msra.mxu0 %v419
  %644 = vmatpush.bf16.msra.mxu0 %v415
  %645 = vmatpush.bf16.msra.mxu0 %v411
  %646 = vmatpush.bf16.msra.mxu0 %v407
  %647 = vmatmul.bf16.gmra.mxu0 %v612
  %v648 = vpop.f32.mrf.mxu0
  %v649 = vadd.f32 0.0, %v648
  %v650 = vpop.f32.mrf.mxu0
  %651 = vdwg.mxu0
  %652 = vmatpush.bf16.msra.mxu0 %v436
  %653 = vmatpush.bf16.msra.mxu0 %v432
  %654 = vmatpush.bf16.msra.mxu0 %v428
  %655 = vmatpush.bf16.msra.mxu0 %v424
  %656 = vmatpush.bf16.msra.mxu0 %v420
  %657 = vmatpush.bf16.msra.mxu0 %v416
  %658 = vmatpush.bf16.msra.mxu0 %v412
  %659 = vmatpush.bf16.msra.mxu0 %v408
  %660 = vmatmul.bf16.gmra.mxu0 %v612
  %v661 = vpop.f32.mrf.mxu0
  %v662 = vadd.f32 0.0, %v661
  %v663 = vpop.f32.mrf.mxu0
  %664 = vdwg.mxu0
  %v665 = vadd.f32 %v608, %v623
  %v666 = vadd.f32 %v609, %v636
  %v667 = vadd.f32 %v610, %v649
  %v668 = vadd.f32 %v611, %v662
  %v669 = vxor.u32 %v665, 2147483648
  %v670 = vxor.u32 %v666, 2147483648
  %v671 = vxor.u32 %v667, 2147483648
  %v672 = vmul.f32 %v669, 1.442695
  %v673 = vpow.pop %v672
  %v674 = vmul.f32 %v670, 1.442695
  %v675 = vpow.pop %v674
  %v676 = vmul.f32 %v671, 1.442695
  %v677 = vpow.pop %v676
  %v678 = vadd.f32 %v673, 1.0
  %v679 = vadd.f32 %v675, 1.0
  %v680 = vadd.f32 %v677, 1.0
  %v681 = vrcp.pop %v678
  %v682 = vmul.f32 %v678, %v681
  %v683 = vsub.f32 1.0, %v682
  %v684 = vmul.f32 %v681, %v683
  %v685 = vadd.f32 %v681, %v684
  %vm686 = vweird.f32 %v678
  %vm687 = vweird.f32 %v681
  %vm688 = vmor %vm686, %vm687
  %v689 = vsel %vm688, %v681, %v685
  %v690 = vand.u32 2147483647, %v678
  %vm691 = vcmp.eq.f32.partialorder %v690, 8.507059e+37
  %v692 = vand.u32 %v678, 2147483648
  %v693 = vor.u32 1.1754944e-38, %v692
  %v694 = vsel %vm691, %v693, %v689
  %v695 = vmul.f32 1.0, %v694
  %v696 = vrcp.pop %v679
  %v697 = vmul.f32 %v679, %v696
  %v698 = vsub.f32 1.0, %v697
  %v699 = vmul.f32 %v696, %v698
  %v700 = vadd.f32 %v696, %v699
  %vm701 = vweird.f32 %v679
  %vm702 = vweird.f32 %v696
  %vm703 = vmor %vm701, %vm702
  %v704 = vsel %vm703, %v696, %v700
  %v705 = vand.u32 2147483647, %v679
  %vm706 = vcmp.eq.f32.partialorder %v705, 8.507059e+37
  %v707 = vand.u32 %v679, 2147483648
  %v708 = vor.u32 1.1754944e-38, %v707
  %v709 = vsel %vm706, %v708, %v704
  %v710 = vmul.f32 1.0, %v709
  %v711 = vrcp.pop %v680
  %v712 = vmul.f32 %v680, %v711
  %v713 = vsub.f32 1.0, %v712
  %v714 = vmul.f32 %v711, %v713
  %v715 = vadd.f32 %v711, %v714
  %vm716 = vweird.f32 %v680
  %vm717 = vweird.f32 %v711
  %vm718 = vmor %vm716, %vm717
  %v719 = vsel %vm718, %v711, %v715
  %v720 = vand.u32 2147483647, %v680
  %vm721 = vcmp.eq.f32.partialorder %v720, 8.507059e+37
  %v722 = vand.u32 %v680, 2147483648
  %v723 = vor.u32 1.1754944e-38, %v722
  %v724 = vsel %vm721, %v723, %v719
  %v725 = vmul.f32 1.0, %v724
  %v726 = vtanh.pop %v668
  %v727 = vmul.f32 %v710, %v604
  %v728 = vmul.f32 %v695, %v726
  %v729 = vadd.f32 %v727, %v728
  %v730 = vtanh.pop %v729
  %v731 = vmul.f32 %v725, %v730
  %vm732 = vcmp.gt.s32.totalorder %v298, 1
  %v733 = vsel %vm732, 1, 0
  %734 = vset.pattern.permute.xlu0 0
  %735 = vperm.xlu0 %734, %v733
  %v736 = vpop.permute.xlu0 %735
  %vm737 = vcmp.eq.s32.totalorder %v736, 1
  %v738 = vsel %vm737, %v731, %v603
  %739 = vst [vmem:[#allocation2] sm:$0xff] %v738
  %v740 = vsel %vm737, %v729, %v604
  %741 = vst [vmem:[#allocation3] sm:$0xff] %v740
  %v742 = vsel %vm737, %v731, 0.0
  %s743 = scalar_lea.vmem [#allocation5], 8
  %744 = vst [vmem:[%s743] sm:$0xff] %v742
  %v745 = vcvt.s32.f32 %v733
  %s746 = scalar_lea.vmem [#allocation6], 8
  %747 = vst.msk [vmem:[%s746] sm:$0xff] %vm601, %v745
  %v748 = vld [vmem:[#allocation2] sm:$0xff]
  %v749 = vld [vmem:[#allocation3] sm:$0xff]
  %s750 = smul.u32 2, 4
  %s751 = smul.addr %s750, 8
  %s752 = scalar_lea.vmem [#allocation4], %s751
  %v753 = vld [vmem:[%s752] sm:$0xff]
  %v754 = vld [vmem:[%s752 + $0x8] sm:$0xff]
  %v755 = vld [vmem:[%s752 + $0x10] sm:$0xff]
  %v756 = vld [vmem:[%s752 + $0x18] sm:$0xff]
  %v757 = vpack.c.bf16 %v748, %v748
  %758 = vmatpush.bf16.msra.mxu0 %v433
  %759 = vmatpush.bf16.msra.mxu0 %v429
  %760 = vmatpush.bf16.msra.mxu0 %v425
  %761 = vmatpush.bf16.msra.mxu0 %v421
  %762 = vmatpush.bf16.msra.mxu0 %v417
  %763 = vmatpush.bf16.msra.mxu0 %v413
  %764 = vmatpush.bf16.msra.mxu0 %v409
  %765 = vmatpush.bf16.msra.mxu0 %v405
  %766 = vmatmul.bf16.gmra.mxu0 %v757
  %v767 = vpop.f32.mrf.mxu0
  %v768 = vadd.f32 0.0, %v767
  %v769 = vpop.f32.mrf.mxu0
  %770 = vdwg.mxu0
  %771 = vmatpush.bf16.msra.mxu0 %v434
  %772 = vmatpush.bf16.msra.mxu0 %v430
  %773 = vmatpush.bf16.msra.mxu0 %v426
  %774 = vmatpush.bf16.msra.mxu0 %v422
  %775 = vmatpush.bf16.msra.mxu0 %v418
  %776 = vmatpush.bf16.msra.mxu0 %v414
  %777 = vmatpush.bf16.msra.mxu0 %v410
  %778 = vmatpush.bf16.msra.mxu0 %v406
  %779 = vmatmul.bf16.gmra.mxu0 %v757
  %v780 = vpop.f32.mrf.mxu0
  %v781 = vadd.f32 0.0, %v780
  %v782 = vpop.f32.mrf.mxu0
  %783 = vdwg.mxu0
  %784 = vmatpush.bf16.msra.mxu0 %v435
  %785 = vmatpush.bf16.msra.mxu0 %v431
  %786 = vmatpush.bf16.msra.mxu0 %v427
  %787 = vmatpush.bf16.msra.mxu0 %v423
  %788 = vmatpush.bf16.msra.mxu0 %v419
  %789 = vmatpush.bf16.msra.mxu0 %v415
  %790 = vmatpush.bf16.msra.mxu0 %v411
  %791 = vmatpush.bf16.msra.mxu0 %v407
  %792 = vmatmul.bf16.gmra.mxu0 %v757
  %v793 = vpop.f32.mrf.mxu0
  %v794 = vadd.f32 0.0, %v793
  %v795 = vpop.f32.mrf.mxu0
  %796 = vdwg.mxu0
  %797 = vmatpush.bf16.msra.mxu0 %v436
  %798 = vmatpush.bf16.msra.mxu0 %v432
  %799 = vmatpush.bf16.msra.mxu0 %v428
  %800 = vmatpush.bf16.msra.mxu0 %v424
  %801 = vmatpush.bf16.msra.mxu0 %v420
  %802 = vmatpush.bf16.msra.mxu0 %v416
  %803 = vmatpush.bf16.msra.mxu0 %v412
  %804 = vmatpush.bf16.msra.mxu0 %v408
  %805 = vmatmul.bf16.gmra.mxu0 %v757
  %v806 = vpop.f32.mrf.mxu0
  %v807 = vadd.f32 0.0, %v806
  %v808 = vpop.f32.mrf.mxu0
  %809 = vdwg.mxu0
  %v810 = vadd.f32 %v753, %v768
  %v811 = vadd.f32 %v754, %v781
  %v812 = vadd.f32 %v755, %v794
  %v813 = vadd.f32 %v756, %v807
  %v814 = vxor.u32 %v810, 2147483648
  %v815 = vxor.u32 %v811, 2147483648
  %v816 = vxor.u32 %v812, 2147483648
  %v817 = vmul.f32 %v814, 1.442695
  %v818 = vpow.pop %v817
  %v819 = vmul.f32 %v815, 1.442695
  %v820 = vpow.pop %v819
  %v821 = vmul.f32 %v816, 1.442695
  %v822 = vpow.pop %v821
  %v823 = vadd.f32 %v818, 1.0
  %v824 = vadd.f32 %v820, 1.0
  %v825 = vadd.f32 %v822, 1.0
  %v826 = vrcp.pop %v823
  %v827 = vmul.f32 %v823, %v826
  %v828 = vsub.f32 1.0, %v827
  %v829 = vmul.f32 %v826, %v828
  %v830 = vadd.f32 %v826, %v829
  %vm831 = vweird.f32 %v823
  %vm832 = vweird.f32 %v826
  %vm833 = vmor %vm831, %vm832
  %v834 = vsel %vm833, %v826, %v830
  %v835 = vand.u32 2147483647, %v823
  %vm836 = vcmp.eq.f32.partialorder %v835, 8.507059e+37
  %v837 = vand.u32 %v823, 2147483648
  %v838 = vor.u32 1.1754944e-38, %v837
  %v839 = vsel %vm836, %v838, %v834
  %v840 = vmul.f32 1.0, %v839
  %v841 = vrcp.pop %v824
  %v842 = vmul.f32 %v824, %v841
  %v843 = vsub.f32 1.0, %v842
  %v844 = vmul.f32 %v841, %v843
  %v845 = vadd.f32 %v841, %v844
  %vm846 = vweird.f32 %v824
  %vm847 = vweird.f32 %v841
  %vm848 = vmor %vm846, %vm847
  %v849 = vsel %vm848, %v841, %v845
  %v850 = vand.u32 2147483647, %v824
  %vm851 = vcmp.eq.f32.partialorder %v850, 8.507059e+37
  %v852 = vand.u32 %v824, 2147483648
  %v853 = vor.u32 1.1754944e-38, %v852
  %v854 = vsel %vm851, %v853, %v849
  %v855 = vmul.f32 1.0, %v854
  %v856 = vrcp.pop %v825
  %v857 = vmul.f32 %v825, %v856
  %v858 = vsub.f32 1.0, %v857
  %v859 = vmul.f32 %v856, %v858
  %v860 = vadd.f32 %v856, %v859
  %vm861 = vweird.f32 %v825
  %vm862 = vweird.f32 %v856
  %vm863 = vmor %vm861, %vm862
  %v864 = vsel %vm863, %v856, %v860
  %v865 = vand.u32 2147483647, %v825
  %vm866 = vcmp.eq.f32.partialorder %v865, 8.507059e+37
  %v867 = vand.u32 %v825, 2147483648
  %v868 = vor.u32 1.1754944e-38, %v867
  %v869 = vsel %vm866, %v868, %v864
  %v870 = vmul.f32 1.0, %v869
  %v871 = vtanh.pop %v813
  %v872 = vmul.f32 %v855, %v749
  %v873 = vmul.f32 %v840, %v871
  %v874 = vadd.f32 %v872, %v873
  %v875 = vtanh.pop %v874
  %v876 = vmul.f32 %v870, %v875
  %vm877 = vcmp.gt.s32.totalorder %v298, 2
  %v878 = vsel %vm877, 1, 0
  %879 = vset.pattern.permute.xlu0 0
  %880 = vperm.xlu0 %879, %v878
  %v881 = vpop.permute.xlu0 %880
  %vm882 = vcmp.eq.s32.totalorder %v881, 1
  %v883 = vsel %vm882, %v876, %v748
  %884 = vst [vmem:[#allocation2] sm:$0xff] %v883
  %v885 = vsel %vm882, %v874, %v749
  %886 = vst [vmem:[#allocation3] sm:$0xff] %v885
  %v887 = vsel %vm882, %v876, 0.0
  %s888 = scalar_lea.vmem [#allocation5], 16
  %889 = vst [vmem:[%s888] sm:$0xff] %v887
  %v890 = vcvt.s32.f32 %v878
  %s891 = scalar_lea.vmem [#allocation6], 16
  %892 = vst.msk [vmem:[%s891] sm:$0xff] %vm601, %v890
  %v893 = vld [vmem:[#allocation2] sm:$0xff]
  %v894 = vld [vmem:[#allocation3] sm:$0xff]
  %s895 = smul.u32 3, 4
  %s896 = smul.addr %s895, 8
  %s897 = scalar_lea.vmem [#allocation4], %s896
  %v898 = vld [vmem:[%s897] sm:$0xff]
  %v899 = vld [vmem:[%s897 + $0x8] sm:$0xff]
  %v900 = vld [vmem:[%s897 + $0x10] sm:$0xff]
  %v901 = vld [vmem:[%s897 + $0x18] sm:$0xff]
  %v902 = vpack.c.bf16 %v893, %v893
  %903 = vmatpush.bf16.msra.mxu0 %v433
  %904 = vmatpush.bf16.msra.mxu0 %v429
  %905 = vmatpush.bf16.msra.mxu0 %v425
  %906 = vmatpush.bf16.msra.mxu0 %v421
  %907 = vmatpush.bf16.msra.mxu0 %v417
  %908 = vmatpush.bf16.msra.mxu0 %v413
  %909 = vmatpush.bf16.msra.mxu0 %v409
  %910 = vmatpush.bf16.msra.mxu0 %v405
  %911 = vmatmul.bf16.gmra.mxu0 %v902
  %v912 = vpop.f32.mrf.mxu0
  %v913 = vadd.f32 0.0, %v912
  %v914 = vpop.f32.mrf.mxu0
  %915 = vdwg.mxu0
  %916 = vmatpush.bf16.msra.mxu0 %v434
  %917 = vmatpush.bf16.msra.mxu0 %v430
  %918 = vmatpush.bf16.msra.mxu0 %v426
  %919 = vmatpush.bf16.msra.mxu0 %v422
  %920 = vmatpush.bf16.msra.mxu0 %v418
  %921 = vmatpush.bf16.msra.mxu0 %v414
  %922 = vmatpush.bf16.msra.mxu0 %v410
  %923 = vmatpush.bf16.msra.mxu0 %v406
  %924 = vmatmul.bf16.gmra.mxu0 %v902
  %v925 = vpop.f32.mrf.mxu0
  %v926 = vadd.f32 0.0, %v925
  %v927 = vpop.f32.mrf.mxu0
  %928 = vdwg.mxu0
  %929 = vmatpush.bf16.msra.mxu0 %v435
  %930 = vmatpush.bf16.msra.mxu0 %v431
  %931 = vmatpush.bf16.msra.mxu0 %v427
  %932 = vmatpush.bf16.msra.mxu0 %v423
  %933 = vmatpush.bf16.msra.mxu0 %v419
  %934 = vmatpush.bf16.msra.mxu0 %v415
  %935 = vmatpush.bf16.msra.mxu0 %v411
  %936 = vmatpush.bf16.msra.mxu0 %v407
  %937 = vmatmul.bf16.gmra.mxu0 %v902
  %v938 = vpop.f32.mrf.mxu0
  %v939 = vadd.f32 0.0, %v938
  %v940 = vpop.f32.mrf.mxu0
  %941 = vdwg.mxu0
  %942 = vmatpush.bf16.msra.mxu0 %v436
  %943 = vmatpush.bf16.msra.mxu0 %v432
  %944 = vmatpush.bf16.msra.mxu0 %v428
  %945 = vmatpush.bf16.msra.mxu0 %v424
  %946 = vmatpush.bf16.msra.mxu0 %v420
  %947 = vmatpush.bf16.msra.mxu0 %v416
  %948 = vmatpush.bf16.msra.mxu0 %v412
  %949 = vmatpush.bf16.msra.mxu0 %v408
  %950 = vmatmul.bf16.gmra.mxu0 %v902
  %v951 = vpop.f32.mrf.mxu0
  %v952 = vadd.f32 0.0, %v951
  %v953 = vpop.f32.mrf.mxu0
  %954 = vdwg.mxu0
  %v955 = vadd.f32 %v898, %v913
  %v956 = vadd.f32 %v899, %v926
  %v957 = vadd.f32 %v900, %v939
  %v958 = vadd.f32 %v901, %v952
  %v959 = vxor.u32 %v955, 2147483648
  %v960 = vxor.u32 %v956, 2147483648
  %v961 = vxor.u32 %v957, 2147483648
  %v962 = vmul.f32 %v959, 1.442695
  %v963 = vpow.pop %v962
  %v964 = vmul.f32 %v960, 1.442695
  %v965 = vpow.pop %v964
  %v966 = vmul.f32 %v961, 1.442695
  %v967 = vpow.pop %v966
  %v968 = vadd.f32 %v963, 1.0
  %v969 = vadd.f32 %v965, 1.0
  %v970 = vadd.f32 %v967, 1.0
  %v971 = vrcp.pop %v968
  %v972 = vmul.f32 %v968, %v971
  %v973 = vsub.f32 1.0, %v972
  %v974 = vmul.f32 %v971, %v973
  %v975 = vadd.f32 %v971, %v974
  %vm976 = vweird.f32 %v968
  %vm977 = vweird.f32 %v971
  %vm978 = vmor %vm976, %vm977
  %v979 = vsel %vm978, %v971, %v975
  %v980 = vand.u32 2147483647, %v968
  %vm981 = vcmp.eq.f32.partialorder %v980, 8.507059e+37
  %v982 = vand.u32 %v968, 2147483648
  %v983 = vor.u32 1.1754944e-38, %v982
  %v984 = vsel %vm981, %v983, %v979
  %v985 = vmul.f32 1.0, %v984
  %v986 = vrcp.pop %v969
  %v987 = vmul.f32 %v969, %v986
  %v988 = vsub.f32 1.0, %v987
  %v989 = vmul.f32 %v986, %v988
  %v990 = vadd.f32 %v986, %v989
  %vm991 = vweird.f32 %v969
  %vm992 = vweird.f32 %v986
  %vm993 = vmor %vm991, %vm992
  %v994 = vsel %vm993, %v986, %v990
  %v995 = vand.u32 2147483647, %v969
  %vm996 = vcmp.eq.f32.partialorder %v995, 8.507059e+37
  %v997 = vand.u32 %v969, 2147483648
  %v998 = vor.u32 1.1754944e-38, %v997
  %v999 = vsel %vm996, %v998, %v994
  %v1000 = vmul.f32 1.0, %v999
  %v1001 = vrcp.pop %v970
  %v1002 = vmul.f32 %v970, %v1001
  %v1003 = vsub.f32 1.0, %v1002
  %v1004 = vmul.f32 %v1001, %v1003
  %v1005 = vadd.f32 %v1001, %v1004
  %vm1006 = vweird.f32 %v970
  %vm1007 = vweird.f32 %v1001
  %vm1008 = vmor %vm1006, %vm1007
  %v1009 = vsel %vm1008, %v1001, %v1005
  %v1010 = vand.u32 2147483647, %v970
  %vm1011 = vcmp.eq.f32.partialorder %v1010, 8.507059e+37
  %v1012 = vand.u32 %v970, 2147483648
  %v1013 = vor.u32 1.1754944e-38, %v1012
  %v1014 = vsel %vm1011, %v1013, %v1009
  %v1015 = vmul.f32 1.0, %v1014
  %v1016 = vtanh.pop %v958
  %v1017 = vmul.f32 %v1000, %v894
  %v1018 = vmul.f32 %v985, %v1016
  %v1019 = vadd.f32 %v1017, %v1018
  %v1020 = vtanh.pop %v1019
  %v1021 = vmul.f32 %v1015, %v1020
  %vm1022 = vcmp.gt.s32.totalorder %v298, 3
  %v1023 = vsel %vm1022, 1, 0
  %1024 = vset.pattern.permute.xlu0 0
  %1025 = vperm.xlu0 %1024, %v1023
  %v1026 = vpop.permute.xlu0 %1025
  %vm1027 = vcmp.eq.s32.totalorder %v1026, 1
  %v1028 = vsel %vm1027, %v1021, %v893
  %1029 = vst [vmem:[#allocation2] sm:$0xff] %v1028
  %v1030 = vsel %vm1027, %v1019, %v894
  %1031 = vst [vmem:[#allocation3] sm:$0xff] %v1030
  %v1032 = vsel %vm1027, %v1021, 0.0
  %s1033 = scalar_lea.vmem [#allocation5], 24
  %1034 = vst [vmem:[%s1033] sm:$0xff] %v1032
  %v1035 = vcvt.s32.f32 %v1023
  %s1036 = scalar_lea.vmem [#allocation6], 24
  %1037 = vst.msk [vmem:[%s1036] sm:$0xff] %vm601, %v1035
  %v1038 = vld [vmem:[#allocation2] sm:$0xff]
  %v1039 = vld [vmem:[#allocation3] sm:$0xff]
  %s1040 = smul.u32 4, 4
  %s1041 = smul.addr %s1040, 8
  %s1042 = scalar_lea.vmem [#allocation4], %s1041
  %v1043 = vld [vmem:[%s1042] sm:$0xff]
  %v1044 = vld [vmem:[%s1042 + $0x8] sm:$0xff]
  %v1045 = vld [vmem:[%s1042 + $0x10] sm:$0xff]
  %v1046 = vld [vmem:[%s1042 + $0x18] sm:$0xff]
  %v1047 = vpack.c.bf16 %v1038, %v1038
  %1048 = vmatpush.bf16.msra.mxu0 %v433
  %1049 = vmatpush.bf16.msra.mxu0 %v429
  %1050 = vmatpush.bf16.msra.mxu0 %v425
  %1051 = vmatpush.bf16.msra.mxu0 %v421
  %1052 = vmatpush.bf16.msra.mxu0 %v417
  %1053 = vmatpush.bf16.msra.mxu0 %v413
  %1054 = vmatpush.bf16.msra.mxu0 %v409
  %1055 = vmatpush.bf16.msra.mxu0 %v405
  %1056 = vmatmul.bf16.gmra.mxu0 %v1047
  %v1057 = vpop.f32.mrf.mxu0
  %v1058 = vadd.f32 0.0, %v1057
  %v1059 = vpop.f32.mrf.mxu0
  %1060 = vdwg.mxu0
  %1061 = vmatpush.bf16.msra.mxu0 %v434
  %1062 = vmatpush.bf16.msra.mxu0 %v430
  %1063 = vmatpush.bf16.msra.mxu0 %v426
  %1064 = vmatpush.bf16.msra.mxu0 %v422
  %1065 = vmatpush.bf16.msra.mxu0 %v418
  %1066 = vmatpush.bf16.msra.mxu0 %v414
  %1067 = vmatpush.bf16.msra.mxu0 %v410
  %1068 = vmatpush.bf16.msra.mxu0 %v406
  %1069 = vmatmul.bf16.gmra.mxu0 %v1047
  %v1070 = vpop.f32.mrf.mxu0
  %v1071 = vadd.f32 0.0, %v1070
  %v1072 = vpop.f32.mrf.mxu0
  %1073 = vdwg.mxu0
  %1074 = vmatpush.bf16.msra.mxu0 %v435
  %1075 = vmatpush.bf16.msra.mxu0 %v431
  %1076 = vmatpush.bf16.msra.mxu0 %v427
  %1077 = vmatpush.bf16.msra.mxu0 %v423
  %1078 = vmatpush.bf16.msra.mxu0 %v419
  %1079 = vmatpush.bf16.msra.mxu0 %v415
  %1080 = vmatpush.bf16.msra.mxu0 %v411
  %1081 = vmatpush.bf16.msra.mxu0 %v407
  %1082 = vmatmul.bf16.gmra.mxu0 %v1047
  %v1083 = vpop.f32.mrf.mxu0
  %v1084 = vadd.f32 0.0, %v1083
  %v1085 = vpop.f32.mrf.mxu0
  %1086 = vdwg.mxu0
  %1087 = vmatpush.bf16.msra.mxu0 %v436
  %1088 = vmatpush.bf16.msra.mxu0 %v432
  %1089 = vmatpush.bf16.msra.mxu0 %v428
  %1090 = vmatpush.bf16.msra.mxu0 %v424
  %1091 = vmatpush.bf16.msra.mxu0 %v420
  %1092 = vmatpush.bf16.msra.mxu0 %v416
  %1093 = vmatpush.bf16.msra.mxu0 %v412
  %1094 = vmatpush.bf16.msra.mxu0 %v408
  %1095 = vmatmul.bf16.gmra.mxu0 %v1047
  %v1096 = vpop.f32.mrf.mxu0
  %v1097 = vadd.f32 0.0, %v1096
  %v1098 = vpop.f32.mrf.mxu0
  %1099 = vdwg.mxu0
  %v1100 = vadd.f32 %v1043, %v1058
  %v1101 = vadd.f32 %v1044, %v1071
  %v1102 = vadd.f32 %v1045, %v1084
  %v1103 = vadd.f32 %v1046, %v1097
  %v1104 = vxor.u32 %v1100, 2147483648
  %v1105 = vxor.u32 %v1101, 2147483648
  %v1106 = vxor.u32 %v1102, 2147483648
  %v1107 = vmul.f32 %v1104, 1.442695
  %v1108 = vpow.pop %v1107
  %v1109 = vmul.f32 %v1105, 1.442695
  %v1110 = vpow.pop %v1109
  %v1111 = vmul.f32 %v1106, 1.442695
  %v1112 = vpow.pop %v1111
  %v1113 = vadd.f32 %v1108, 1.0
  %v1114 = vadd.f32 %v1110, 1.0
  %v1115 = vadd.f32 %v1112, 1.0
  %v1116 = vrcp.pop %v1113
  %v1117 = vmul.f32 %v1113, %v1116
  %v1118 = vsub.f32 1.0, %v1117
  %v1119 = vmul.f32 %v1116, %v1118
  %v1120 = vadd.f32 %v1116, %v1119
  %vm1121 = vweird.f32 %v1113
  %vm1122 = vweird.f32 %v1116
  %vm1123 = vmor %vm1121, %vm1122
  %v1124 = vsel %vm1123, %v1116, %v1120
  %v1125 = vand.u32 2147483647, %v1113
  %vm1126 = vcmp.eq.f32.partialorder %v1125, 8.507059e+37
  %v1127 = vand.u32 %v1113, 2147483648
  %v1128 = vor.u32 1.1754944e-38, %v1127
  %v1129 = vsel %vm1126, %v1128, %v1124
  %v1130 = vmul.f32 1.0, %v1129
  %v1131 = vrcp.pop %v1114
  %v1132 = vmul.f32 %v1114, %v1131
  %v1133 = vsub.f32 1.0, %v1132
  %v1134 = vmul.f32 %v1131, %v1133
  %v1135 = vadd.f32 %v1131, %v1134
  %vm1136 = vweird.f32 %v1114
  %vm1137 = vweird.f32 %v1131
  %vm1138 = vmor %vm1136, %vm1137
  %v1139 = vsel %vm1138, %v1131, %v1135
  %v1140 = vand.u32 2147483647, %v1114
  %vm1141 = vcmp.eq.f32.partialorder %v1140, 8.507059e+37
  %v1142 = vand.u32 %v1114, 2147483648
  %v1143 = vor.u32 1.1754944e-38, %v1142
  %v1144 = vsel %vm1141, %v1143, %v1139
  %v1145 = vmul.f32 1.0, %v1144
  %v1146 = vrcp.pop %v1115
  %v1147 = vmul.f32 %v1115, %v1146
  %v1148 = vsub.f32 1.0, %v1147
  %v1149 = vmul.f32 %v1146, %v1148
  %v1150 = vadd.f32 %v1146, %v1149
  %vm1151 = vweird.f32 %v1115
  %vm1152 = vweird.f32 %v1146
  %vm1153 = vmor %vm1151, %vm1152
  %v1154 = vsel %vm1153, %v1146, %v1150
  %v1155 = vand.u32 2147483647, %v1115
  %vm1156 = vcmp.eq.f32.partialorder %v1155, 8.507059e+37
  %v1157 = vand.u32 %v1115, 2147483648
  %v1158 = vor.u32 1.1754944e-38, %v1157
  %v1159 = vsel %vm1156, %v1158, %v1154
  %v1160 = vmul.f32 1.0, %v1159
  %v1161 = vtanh.pop %v1103
  %v1162 = vmul.f32 %v1145, %v1039
  %v1163 = vmul.f32 %v1130, %v1161
  %v1164 = vadd.f32 %v1162, %v1163
  %v1165 = vtanh.pop %v1164
  %v1166 = vmul.f32 %v1160, %v1165
  %vm1167 = vcmp.gt.s32.totalorder %v298, 4
  %v1168 = vsel %vm1167, 1, 0
  %1169 = vset.pattern.permute.xlu0 0
  %1170 = vperm.xlu0 %1169, %v1168
  %v1171 = vpop.permute.xlu0 %1170
  %vm1172 = vcmp.eq.s32.totalorder %v1171, 1
  %v1173 = vsel %vm1172, %v1166, %v1038
  %1174 = vst [vmem:[#allocation2] sm:$0xff] %v1173
  %v1175 = vsel %vm1172, %v1164, %v1039
  %1176 = vst [vmem:[#allocation3] sm:$0xff] %v1175
  %v1177 = vsel %vm1172, %v1166, 0.0
  %s1178 = scalar_lea.vmem [#allocation5], 32
  %1179 = vst [vmem:[%s1178] sm:$0xff] %v1177
  %v1180 = vcvt.s32.f32 %v1168
  %s1181 = scalar_lea.vmem [#allocation6], 32
  %1182 = vst.msk [vmem:[%s1181] sm:$0xff] %vm601, %v1180
  %v1183 = vld [vmem:[#allocation2] sm:$0xff]
  %v1184 = vld [vmem:[#allocation3] sm:$0xff]
  %s1185 = smul.u32 5, 4
  %s1186 = smul.addr %s1185, 8
  %s1187 = scalar_lea.vmem [#allocation4], %s1186
  %v1188 = vld [vmem:[%s1187] sm:$0xff]
  %v1189 = vld [vmem:[%s1187 + $0x8] sm:$0xff]
  %v1190 = vld [vmem:[%s1187 + $0x10] sm:$0xff]
  %v1191 = vld [vmem:[%s1187 + $0x18] sm:$0xff]
  %v1192 = vpack.c.bf16 %v1183, %v1183
  %1193 = vmatpush.bf16.msra.mxu0 %v433
  %1194 = vmatpush.bf16.msra.mxu0 %v429
  %1195 = vmatpush.bf16.msra.mxu0 %v425
  %1196 = vmatpush.bf16.msra.mxu0 %v421
  %1197 = vmatpush.bf16.msra.mxu0 %v417
  %1198 = vmatpush.bf16.msra.mxu0 %v413
  %1199 = vmatpush.bf16.msra.mxu0 %v409
  %1200 = vmatpush.bf16.msra.mxu0 %v405
  %1201 = vmatmul.bf16.gmra.mxu0 %v1192
  %v1202 = vpop.f32.mrf.mxu0
  %v1203 = vadd.f32 0.0, %v1202
  %v1204 = vpop.f32.mrf.mxu0
  %1205 = vdwg.mxu0
  %1206 = vmatpush.bf16.msra.mxu0 %v434
  %1207 = vmatpush.bf16.msra.mxu0 %v430
  %1208 = vmatpush.bf16.msra.mxu0 %v426
  %1209 = vmatpush.bf16.msra.mxu0 %v422
  %1210 = vmatpush.bf16.msra.mxu0 %v418
  %1211 = vmatpush.bf16.msra.mxu0 %v414
  %1212 = vmatpush.bf16.msra.mxu0 %v410
  %1213 = vmatpush.bf16.msra.mxu0 %v406
  %1214 = vmatmul.bf16.gmra.mxu0 %v1192
  %v1215 = vpop.f32.mrf.mxu0
  %v1216 = vadd.f32 0.0, %v1215
  %v1217 = vpop.f32.mrf.mxu0
  %1218 = vdwg.mxu0
  %1219 = vmatpush.bf16.msra.mxu0 %v435
  %1220 = vmatpush.bf16.msra.mxu0 %v431
  %1221 = vmatpush.bf16.msra.mxu0 %v427
  %1222 = vmatpush.bf16.msra.mxu0 %v423
  %1223 = vmatpush.bf16.msra.mxu0 %v419
  %1224 = vmatpush.bf16.msra.mxu0 %v415
  %1225 = vmatpush.bf16.msra.mxu0 %v411
  %1226 = vmatpush.bf16.msra.mxu0 %v407
  %1227 = vmatmul.bf16.gmra.mxu0 %v1192
  %v1228 = vpop.f32.mrf.mxu0
  %v1229 = vadd.f32 0.0, %v1228
  %v1230 = vpop.f32.mrf.mxu0
  %1231 = vdwg.mxu0
  %1232 = vmatpush.bf16.msra.mxu0 %v436
  %1233 = vmatpush.bf16.msra.mxu0 %v432
  %1234 = vmatpush.bf16.msra.mxu0 %v428
  %1235 = vmatpush.bf16.msra.mxu0 %v424
  %1236 = vmatpush.bf16.msra.mxu0 %v420
  %1237 = vmatpush.bf16.msra.mxu0 %v416
  %1238 = vmatpush.bf16.msra.mxu0 %v412
  %1239 = vmatpush.bf16.msra.mxu0 %v408
  %1240 = vmatmul.bf16.gmra.mxu0 %v1192
  %v1241 = vpop.f32.mrf.mxu0
  %v1242 = vadd.f32 0.0, %v1241
  %v1243 = vpop.f32.mrf.mxu0
  %1244 = vdwg.mxu0
  %v1245 = vadd.f32 %v1188, %v1203
  %v1246 = vadd.f32 %v1189, %v1216
  %v1247 = vadd.f32 %v1190, %v1229
  %v1248 = vadd.f32 %v1191, %v1242
  %v1249 = vxor.u32 %v1245, 2147483648
  %v1250 = vxor.u32 %v1246, 2147483648
  %v1251 = vxor.u32 %v1247, 2147483648
  %v1252 = vmul.f32 %v1249, 1.442695
  %v1253 = vpow.pop %v1252
  %v1254 = vmul.f32 %v1250, 1.442695
  %v1255 = vpow.pop %v1254
  %v1256 = vmul.f32 %v1251, 1.442695
  %v1257 = vpow.pop %v1256
  %v1258 = vadd.f32 %v1253, 1.0
  %v1259 = vadd.f32 %v1255, 1.0
  %v1260 = vadd.f32 %v1257, 1.0
  %v1261 = vrcp.pop %v1258
  %v1262 = vmul.f32 %v1258, %v1261
  %v1263 = vsub.f32 1.0, %v1262
  %v1264 = vmul.f32 %v1261, %v1263
  %v1265 = vadd.f32 %v1261, %v1264
  %vm1266 = vweird.f32 %v1258
  %vm1267 = vweird.f32 %v1261
  %vm1268 = vmor %vm1266, %vm1267
  %v1269 = vsel %vm1268, %v1261, %v1265
  %v1270 = vand.u32 2147483647, %v1258
  %vm1271 = vcmp.eq.f32.partialorder %v1270, 8.507059e+37
  %v1272 = vand.u32 %v1258, 2147483648
  %v1273 = vor.u32 1.1754944e-38, %v1272
  %v1274 = vsel %vm1271, %v1273, %v1269
  %v1275 = vmul.f32 1.0, %v1274
  %v1276 = vrcp.pop %v1259
  %v1277 = vmul.f32 %v1259, %v1276
  %v1278 = vsub.f32 1.0, %v1277
  %v1279 = vmul.f32 %v1276, %v1278
  %v1280 = vadd.f32 %v1276, %v1279
  %vm1281 = vweird.f32 %v1259
  %vm1282 = vweird.f32 %v1276
  %vm1283 = vmor %vm1281, %vm1282
  %v1284 = vsel %vm1283, %v1276, %v1280
  %v1285 = vand.u32 2147483647, %v1259
  %vm1286 = vcmp.eq.f32.partialorder %v1285, 8.507059e+37
  %v1287 = vand.u32 %v1259, 2147483648
  %v1288 = vor.u32 1.1754944e-38, %v1287
  %v1289 = vsel %vm1286, %v1288, %v1284
  %v1290 = vmul.f32 1.0, %v1289
  %v1291 = vrcp.pop %v1260
  %v1292 = vmul.f32 %v1260, %v1291
  %v1293 = vsub.f32 1.0, %v1292
  %v1294 = vmul.f32 %v1291, %v1293
  %v1295 = vadd.f32 %v1291, %v1294
  %vm1296 = vweird.f32 %v1260
  %vm1297 = vweird.f32 %v1291
  %vm1298 = vmor %vm1296, %vm1297
  %v1299 = vsel %vm1298, %v1291, %v1295
  %v1300 = vand.u32 2147483647, %v1260
  %vm1301 = vcmp.eq.f32.partialorder %v1300, 8.507059e+37
  %v1302 = vand.u32 %v1260, 2147483648
  %v1303 = vor.u32 1.1754944e-38, %v1302
  %v1304 = vsel %vm1301, %v1303, %v1299
  %v1305 = vmul.f32 1.0, %v1304
  %v1306 = vtanh.pop %v1248
  %v1307 = vmul.f32 %v1290, %v1184
  %v1308 = vmul.f32 %v1275, %v1306
  %v1309 = vadd.f32 %v1307, %v1308
  %v1310 = vtanh.pop %v1309
  %v1311 = vmul.f32 %v1305, %v1310
  %vm1312 = vcmp.gt.s32.totalorder %v298, 5
  %v1313 = vsel %vm1312, 1, 0
  %1314 = vset.pattern.permute.xlu0 0
  %1315 = vperm.xlu0 %1314, %v1313
  %v1316 = vpop.permute.xlu0 %1315
  %vm1317 = vcmp.eq.s32.totalorder %v1316, 1
  %v1318 = vsel %vm1317, %v1311, %v1183
  %1319 = vst [vmem:[#allocation2] sm:$0xff] %v1318
  %v1320 = vsel %vm1317, %v1309, %v1184
  %1321 = vst [vmem:[#allocation3] sm:$0xff] %v1320
  %v1322 = vsel %vm1317, %v1311, 0.0
  %s1323 = scalar_lea.vmem [#allocation5], 40
  %1324 = vst [vmem:[%s1323] sm:$0xff] %v1322
  %v1325 = vcvt.s32.f32 %v1313
  %s1326 = scalar_lea.vmem [#allocation6], 40
  %1327 = vst.msk [vmem:[%s1326] sm:$0xff] %vm601, %v1325
  %v1328 = vld [vmem:[#allocation2] sm:$0xff]
  %v1329 = vld [vmem:[#allocation3] sm:$0xff]
  %s1330 = smul.u32 6, 4
  %s1331 = smul.addr %s1330, 8
  %s1332 = scalar_lea.vmem [#allocation4], %s1331
  %v1333 = vld [vmem:[%s1332] sm:$0xff]
  %v1334 = vld [vmem:[%s1332 + $0x8] sm:$0xff]
  %v1335 = vld [vmem:[%s1332 + $0x10] sm:$0xff]
  %v1336 = vld [vmem:[%s1332 + $0x18] sm:$0xff]
  %v1337 = vpack.c.bf16 %v1328, %v1328
  %1338 = vmatpush.bf16.msra.mxu0 %v433
  %1339 = vmatpush.bf16.msra.mxu0 %v429
  %1340 = vmatpush.bf16.msra.mxu0 %v425
  %1341 = vmatpush.bf16.msra.mxu0 %v421
  %1342 = vmatpush.bf16.msra.mxu0 %v417
  %1343 = vmatpush.bf16.msra.mxu0 %v413
  %1344 = vmatpush.bf16.msra.mxu0 %v409
  %1345 = vmatpush.bf16.msra.mxu0 %v405
  %1346 = vmatmul.bf16.gmra.mxu0 %v1337
  %v1347 = vpop.f32.mrf.mxu0
  %v1348 = vadd.f32 0.0, %v1347
  %v1349 = vpop.f32.mrf.mxu0
  %1350 = vdwg.mxu0
  %1351 = vmatpush.bf16.msra.mxu0 %v434
  %1352 = vmatpush.bf16.msra.mxu0 %v430
  %1353 = vmatpush.bf16.msra.mxu0 %v426
  %1354 = vmatpush.bf16.msra.mxu0 %v422
  %1355 = vmatpush.bf16.msra.mxu0 %v418
  %1356 = vmatpush.bf16.msra.mxu0 %v414
  %1357 = vmatpush.bf16.msra.mxu0 %v410
  %1358 = vmatpush.bf16.msra.mxu0 %v406
  %1359 = vmatmul.bf16.gmra.mxu0 %v1337
  %v1360 = vpop.f32.mrf.mxu0
  %v1361 = vadd.f32 0.0, %v1360
  %v1362 = vpop.f32.mrf.mxu0
  %1363 = vdwg.mxu0
  %1364 = vmatpush.bf16.msra.mxu0 %v435
  %1365 = vmatpush.bf16.msra.mxu0 %v431
  %1366 = vmatpush.bf16.msra.mxu0 %v427
  %1367 = vmatpush.bf16.msra.mxu0 %v423
  %1368 = vmatpush.bf16.msra.mxu0 %v419
  %1369 = vmatpush.bf16.msra.mxu0 %v415
  %1370 = vmatpush.bf16.msra.mxu0 %v411
  %1371 = vmatpush.bf16.msra.mxu0 %v407
  %1372 = vmatmul.bf16.gmra.mxu0 %v1337
  %v1373 = vpop.f32.mrf.mxu0
  %v1374 = vadd.f32 0.0, %v1373
  %v1375 = vpop.f32.mrf.mxu0
  %1376 = vdwg.mxu0
  %1377 = vmatpush.bf16.msra.mxu0 %v436
  %1378 = vmatpush.bf16.msra.mxu0 %v432
  %1379 = vmatpush.bf16.msra.mxu0 %v428
  %1380 = vmatpush.bf16.msra.mxu0 %v424
  %1381 = vmatpush.bf16.msra.mxu0 %v420
  %1382 = vmatpush.bf16.msra.mxu0 %v416
  %1383 = vmatpush.bf16.msra.mxu0 %v412
  %1384 = vmatpush.bf16.msra.mxu0 %v408
  %1385 = vmatmul.bf16.gmra.mxu0 %v1337
  %v1386 = vpop.f32.mrf.mxu0
  %v1387 = vadd.f32 0.0, %v1386
  %v1388 = vpop.f32.mrf.mxu0
  %1389 = vdwg.mxu0
  %v1390 = vadd.f32 %v1333, %v1348
  %v1391 = vadd.f32 %v1334, %v1361
  %v1392 = vadd.f32 %v1335, %v1374
  %v1393 = vadd.f32 %v1336, %v1387
  %v1394 = vxor.u32 %v1390, 2147483648
  %v1395 = vxor.u32 %v1391, 2147483648
  %v1396 = vxor.u32 %v1392, 2147483648
  %v1397 = vmul.f32 %v1394, 1.442695
  %v1398 = vpow.pop %v1397
  %v1399 = vmul.f32 %v1395, 1.442695
  %v1400 = vpow.pop %v1399
  %v1401 = vmul.f32 %v1396, 1.442695
  %v1402 = vpow.pop %v1401
  %v1403 = vadd.f32 %v1398, 1.0
  %v1404 = vadd.f32 %v1400, 1.0
  %v1405 = vadd.f32 %v1402, 1.0
  %v1406 = vrcp.pop %v1403
  %v1407 = vmul.f32 %v1403, %v1406
  %v1408 = vsub.f32 1.0, %v1407
  %v1409 = vmul.f32 %v1406, %v1408
  %v1410 = vadd.f32 %v1406, %v1409
  %vm1411 = vweird.f32 %v1403
  %vm1412 = vweird.f32 %v1406
  %vm1413 = vmor %vm1411, %vm1412
  %v1414 = vsel %vm1413, %v1406, %v1410
  %v1415 = vand.u32 2147483647, %v1403
  %vm1416 = vcmp.eq.f32.partialorder %v1415, 8.507059e+37
  %v1417 = vand.u32 %v1403, 2147483648
  %v1418 = vor.u32 1.1754944e-38, %v1417
  %v1419 = vsel %vm1416, %v1418, %v1414
  %v1420 = vmul.f32 1.0, %v1419
  %v1421 = vrcp.pop %v1404
  %v1422 = vmul.f32 %v1404, %v1421
  %v1423 = vsub.f32 1.0, %v1422
  %v1424 = vmul.f32 %v1421, %v1423
  %v1425 = vadd.f32 %v1421, %v1424
  %vm1426 = vweird.f32 %v1404
  %vm1427 = vweird.f32 %v1421
  %vm1428 = vmor %vm1426, %vm1427
  %v1429 = vsel %vm1428, %v1421, %v1425
  %v1430 = vand.u32 2147483647, %v1404
  %vm1431 = vcmp.eq.f32.partialorder %v1430, 8.507059e+37
  %v1432 = vand.u32 %v1404, 2147483648
  %v1433 = vor.u32 1.1754944e-38, %v1432
  %v1434 = vsel %vm1431, %v1433, %v1429
  %v1435 = vmul.f32 1.0, %v1434
  %v1436 = vrcp.pop %v1405
  %v1437 = vmul.f32 %v1405, %v1436
  %v1438 = vsub.f32 1.0, %v1437
  %v1439 = vmul.f32 %v1436, %v1438
  %v1440 = vadd.f32 %v1436, %v1439
  %vm1441 = vweird.f32 %v1405
  %vm1442 = vweird.f32 %v1436
  %vm1443 = vmor %vm1441, %vm1442
  %v1444 = vsel %vm1443, %v1436, %v1440
  %v1445 = vand.u32 2147483647, %v1405
  %vm1446 = vcmp.eq.f32.partialorder %v1445, 8.507059e+37
  %v1447 = vand.u32 %v1405, 2147483648
  %v1448 = vor.u32 1.1754944e-38, %v1447
  %v1449 = vsel %vm1446, %v1448, %v1444
  %v1450 = vmul.f32 1.0, %v1449
  %v1451 = vtanh.pop %v1393
  %v1452 = vmul.f32 %v1435, %v1329
  %v1453 = vmul.f32 %v1420, %v1451
  %v1454 = vadd.f32 %v1452, %v1453
  %v1455 = vtanh.pop %v1454
  %v1456 = vmul.f32 %v1450, %v1455
  %vm1457 = vcmp.gt.s32.totalorder %v298, 6
  %v1458 = vsel %vm1457, 1, 0
  %1459 = vset.pattern.permute.xlu0 0
  %1460 = vperm.xlu0 %1459, %v1458
  %v1461 = vpop.permute.xlu0 %1460
  %vm1462 = vcmp.eq.s32.totalorder %v1461, 1
  %v1463 = vsel %vm1462, %v1456, %v1328
  %1464 = vst [vmem:[#allocation2] sm:$0xff] %v1463
  %v1465 = vsel %vm1462, %v1454, %v1329
  %1466 = vst [vmem:[#allocation3] sm:$0xff] %v1465
  %v1467 = vsel %vm1462, %v1456, 0.0
  %s1468 = scalar_lea.vmem [#allocation5], 48
  %1469 = vst [vmem:[%s1468] sm:$0xff] %v1467
  %v1470 = vcvt.s32.f32 %v1458
  %s1471 = scalar_lea.vmem [#allocation6], 48
  %1472 = vst.msk [vmem:[%s1471] sm:$0xff] %vm601, %v1470
  %v1473 = vld [vmem:[#allocation2] sm:$0xff]
  %v1474 = vld [vmem:[#allocation3] sm:$0xff]
  %s1475 = smul.u32 7, 4
  %s1476 = smul.addr %s1475, 8
  %s1477 = scalar_lea.vmem [#allocation4], %s1476
  %v1478 = vld [vmem:[%s1477] sm:$0xff]
  %v1479 = vld [vmem:[%s1477 + $0x8] sm:$0xff]
  %v1480 = vld [vmem:[%s1477 + $0x10] sm:$0xff]
  %v1481 = vld [vmem:[%s1477 + $0x18] sm:$0xff]
  %v1482 = vpack.c.bf16 %v1473, %v1473
  %1483 = vmatpush.bf16.msra.mxu0 %v433
  %1484 = vmatpush.bf16.msra.mxu0 %v429
  %1485 = vmatpush.bf16.msra.mxu0 %v425
  %1486 = vmatpush.bf16.msra.mxu0 %v421
  %1487 = vmatpush.bf16.msra.mxu0 %v417
  %1488 = vmatpush.bf16.msra.mxu0 %v413
  %1489 = vmatpush.bf16.msra.mxu0 %v409
  %1490 = vmatpush.bf16.msra.mxu0 %v405
  %1491 = vmatmul.bf16.gmra.mxu0 %v1482
  %v1492 = vpop.f32.mrf.mxu0
  %v1493 = vadd.f32 0.0, %v1492
  %v1494 = vpop.f32.mrf.mxu0
  %1495 = vdwg.mxu0
  %1496 = vmatpush.bf16.msra.mxu0 %v434
  %1497 = vmatpush.bf16.msra.mxu0 %v430
  %1498 = vmatpush.bf16.msra.mxu0 %v426
  %1499 = vmatpush.bf16.msra.mxu0 %v422
  %1500 = vmatpush.bf16.msra.mxu0 %v418
  %1501 = vmatpush.bf16.msra.mxu0 %v414
  %1502 = vmatpush.bf16.msra.mxu0 %v410
  %1503 = vmatpush.bf16.msra.mxu0 %v406
  %1504 = vmatmul.bf16.gmra.mxu0 %v1482
  %v1505 = vpop.f32.mrf.mxu0
  %v1506 = vadd.f32 0.0, %v1505
  %v1507 = vpop.f32.mrf.mxu0
  %1508 = vdwg.mxu0
  %1509 = vmatpush.bf16.msra.mxu0 %v435
  %1510 = vmatpush.bf16.msra.mxu0 %v431
  %1511 = vmatpush.bf16.msra.mxu0 %v427
  %1512 = vmatpush.bf16.msra.mxu0 %v423
  %1513 = vmatpush.bf16.msra.mxu0 %v419
  %1514 = vmatpush.bf16.msra.mxu0 %v415
  %1515 = vmatpush.bf16.msra.mxu0 %v411
  %1516 = vmatpush.bf16.msra.mxu0 %v407
  %1517 = vmatmul.bf16.gmra.mxu0 %v1482
  %v1518 = vpop.f32.mrf.mxu0
  %v1519 = vadd.f32 0.0, %v1518
  %v1520 = vpop.f32.mrf.mxu0
  %1521 = vdwg.mxu0
  %1522 = vmatpush.bf16.msra.mxu0 %v436
  %1523 = vmatpush.bf16.msra.mxu0 %v432
  %1524 = vmatpush.bf16.msra.mxu0 %v428
  %1525 = vmatpush.bf16.msra.mxu0 %v424
  %1526 = vmatpush.bf16.msra.mxu0 %v420
  %1527 = vmatpush.bf16.msra.mxu0 %v416
  %1528 = vmatpush.bf16.msra.mxu0 %v412
  %1529 = vmatpush.bf16.msra.mxu0 %v408
  %1530 = vmatmul.bf16.gmra.mxu0 %v1482
  %v1531 = vpop.f32.mrf.mxu0
  %v1532 = vadd.f32 0.0, %v1531
  %v1533 = vpop.f32.mrf.mxu0
  %1534 = vdwg.mxu0
  %v1535 = vadd.f32 %v1478, %v1493
  %v1536 = vadd.f32 %v1479, %v1506
  %v1537 = vadd.f32 %v1480, %v1519
  %v1538 = vadd.f32 %v1481, %v1532
  %v1539 = vxor.u32 %v1535, 2147483648
  %v1540 = vxor.u32 %v1536, 2147483648
  %v1541 = vxor.u32 %v1537, 2147483648
  %v1542 = vmul.f32 %v1539, 1.442695
  %v1543 = vpow.pop %v1542
  %v1544 = vmul.f32 %v1540, 1.442695
  %v1545 = vpow.pop %v1544
  %v1546 = vmul.f32 %v1541, 1.442695
  %v1547 = vpow.pop %v1546
  %v1548 = vadd.f32 %v1543, 1.0
  %v1549 = vadd.f32 %v1545, 1.0
  %v1550 = vadd.f32 %v1547, 1.0
  %v1551 = vrcp.pop %v1548
  %v1552 = vmul.f32 %v1548, %v1551
  %v1553 = vsub.f32 1.0, %v1552
  %v1554 = vmul.f32 %v1551, %v1553
  %v1555 = vadd.f32 %v1551, %v1554
  %vm1556 = vweird.f32 %v1548
  %vm1557 = vweird.f32 %v1551
  %vm1558 = vmor %vm1556, %vm1557
  %v1559 = vsel %vm1558, %v1551, %v1555
  %v1560 = vand.u32 2147483647, %v1548
  %vm1561 = vcmp.eq.f32.partialorder %v1560, 8.507059e+37
  %v1562 = vand.u32 %v1548, 2147483648
  %v1563 = vor.u32 1.1754944e-38, %v1562
  %v1564 = vsel %vm1561, %v1563, %v1559
  %v1565 = vmul.f32 1.0, %v1564
  %v1566 = vrcp.pop %v1549
  %v1567 = vmul.f32 %v1549, %v1566
  %v1568 = vsub.f32 1.0, %v1567
  %v1569 = vmul.f32 %v1566, %v1568
  %v1570 = vadd.f32 %v1566, %v1569
  %vm1571 = vweird.f32 %v1549
  %vm1572 = vweird.f32 %v1566
  %vm1573 = vmor %vm1571, %vm1572
  %v1574 = vsel %vm1573, %v1566, %v1570
  %v1575 = vand.u32 2147483647, %v1549
  %vm1576 = vcmp.eq.f32.partialorder %v1575, 8.507059e+37
  %v1577 = vand.u32 %v1549, 2147483648
  %v1578 = vor.u32 1.1754944e-38, %v1577
  %v1579 = vsel %vm1576, %v1578, %v1574
  %v1580 = vmul.f32 1.0, %v1579
  %v1581 = vrcp.pop %v1550
  %v1582 = vmul.f32 %v1550, %v1581
  %v1583 = vsub.f32 1.0, %v1582
  %v1584 = vmul.f32 %v1581, %v1583
  %v1585 = vadd.f32 %v1581, %v1584
  %vm1586 = vweird.f32 %v1550
  %vm1587 = vweird.f32 %v1581
  %vm1588 = vmor %vm1586, %vm1587
  %v1589 = vsel %vm1588, %v1581, %v1585
  %v1590 = vand.u32 2147483647, %v1550
  %vm1591 = vcmp.eq.f32.partialorder %v1590, 8.507059e+37
  %v1592 = vand.u32 %v1550, 2147483648
  %v1593 = vor.u32 1.1754944e-38, %v1592
  %v1594 = vsel %vm1591, %v1593, %v1589
  %v1595 = vmul.f32 1.0, %v1594
  %v1596 = vtanh.pop %v1538
  %v1597 = vmul.f32 %v1580, %v1474
  %v1598 = vmul.f32 %v1565, %v1596
  %v1599 = vadd.f32 %v1597, %v1598
  %v1600 = vtanh.pop %v1599
  %v1601 = vmul.f32 %v1595, %v1600
  %vm1602 = vcmp.gt.s32.totalorder %v298, 7
  %v1603 = vsel %vm1602, 1, 0
  %1604 = vset.pattern.permute.xlu0 0
  %1605 = vperm.xlu0 %1604, %v1603
  %v1606 = vpop.permute.xlu0 %1605
  %vm1607 = vcmp.eq.s32.totalorder %v1606, 1
  %v1608 = vsel %vm1607, %v1601, %v1473
  %1609 = vst [vmem:[#allocation2] sm:$0xff] %v1608
  %v1610 = vsel %vm1607, %v1599, %v1474
  %1611 = vst [vmem:[#allocation3] sm:$0xff] %v1610
  %v1612 = vsel %vm1607, %v1601, 0.0
  %s1613 = scalar_lea.vmem [#allocation5], 56
  %1614 = vst [vmem:[%s1613] sm:$0xff] %v1612
  %v1615 = vcvt.s32.f32 %v1603
  %s1616 = scalar_lea.vmem [#allocation6], 56
  %1617 = vst.msk [vmem:[%s1616] sm:$0xff] %vm601, %v1615
  %v1618 = vld [vmem:[#allocation5] sm:$0xff]
  %v1619 = vld [vmem:[#allocation5 + $0x8] sm:$0xff]
  %v1620 = vld [vmem:[#allocation5 + $0x10] sm:$0xff]
  %v1621 = vld [vmem:[#allocation5 + $0x18] sm:$0xff]
  %v1622 = vld [vmem:[#allocation5 + $0x20] sm:$0xff]
  %v1623 = vld [vmem:[#allocation5 + $0x28] sm:$0xff]
  %v1624 = vld [vmem:[#allocation5 + $0x30] sm:$0xff]
  %v1625 = vld [vmem:[#allocation5 + $0x38] sm:$0xff]
  %v1626 = vpack.c.bf16 %v1619, %v1618
  %v1627 = vpack.c.bf16 %v1621, %v1620
  %v1628 = vpack.c.bf16 %v1623, %v1622
  %v1629 = vpack.c.bf16 %v1625, %v1624
  %v1630 = vld [vmem:[%s6] sm:$0xf]
  %v1631 = vld [vmem:[%s6 + $0x4] sm:$0xf]
  %v1632 = vld [vmem:[%s6 + $0x8] sm:$0xf]
  %v1633 = vld [vmem:[%s6 + $0xc] sm:$0xf]
  %v1634 = vld [vmem:[%s6 + $0x10] sm:$0xf]
  %v1635 = vld [vmem:[%s6 + $0x14] sm:$0xf]
  %v1636 = vld [vmem:[%s6 + $0x18] sm:$0xf]
  %v1637 = vld [vmem:[%s6 + $0x1c] sm:$0xf]
  %v1638 = vld [vmem:[%s6 + $0x20] sm:$0xf]
  %v1639 = vld [vmem:[%s6 + $0x24] sm:$0xf]
  %v1640 = vld [vmem:[%s6 + $0x28] sm:$0xf]
  %v1641 = vld [vmem:[%s6 + $0x2c] sm:$0xf]
  %v1642 = vld [vmem:[%s6 + $0x30] sm:$0xf]
  %v1643 = vld [vmem:[%s6 + $0x34] sm:$0xf]
  %v1644 = vld [vmem:[%s6 + $0x38] sm:$0xf]
  %v1645 = vld [vmem:[%s6 + $0x3c] sm:$0xf]
  %v1646 = vld [vmem:[%s7] sm:$0x1]
  %v1648 = vperm.slane %v1646, 0
  %v1666 = vunpack.c.l.b16 %v1630
  %v1667 = vunpack.c.l.b16 %v1631
  %v1668 = vunpack.c.l.b16 %v1632
  %v1669 = vunpack.c.l.b16 %v1633
  %v1670 = vunpack.c.l.b16 %v1634
  %v1671 = vunpack.c.l.b16 %v1635
  %v1672 = vunpack.c.l.b16 %v1636
  %v1673 = vunpack.c.l.b16 %v1637
  %v1674 = vunpack.c.l.b16 %v1638
  %v1675 = vunpack.c.l.b16 %v1639
  %v1676 = vunpack.c.l.b16 %v1640
  %v1677 = vunpack.c.l.b16 %v1641
  %v1678 = vunpack.c.l.b16 %v1642
  %v1679 = vunpack.c.l.b16 %v1643
  %v1680 = vunpack.c.l.b16 %v1644
  %v1681 = vunpack.c.l.b16 %v1645
  %v1682 = vpack.c.b16 %v1667, %v1666
  %v1683 = vpack.c.b16 %v1669, %v1668
  %v1684 = vpack.c.b16 %v1671, %v1670
  %v1685 = vpack.c.b16 %v1673, %v1672
  %v1686 = vpack.c.b16 %v1675, %v1674
  %v1687 = vpack.c.b16 %v1677, %v1676
  %v1688 = vpack.c.b16 %v1679, %v1678
  %v1689 = vpack.c.b16 %v1681, %v1680
  %1698 = vmatpush.bf16.msra.mxu0 %v1689
  %1699 = vmatpush.bf16.msra.mxu0 %v1688
  %1700 = vmatpush.bf16.msra.mxu0 %v1687
  %1701 = vmatpush.bf16.msra.mxu0 %v1686
  %1702 = vmatpush.bf16.msra.mxu0 %v1685
  %1703 = vmatpush.bf16.msra.mxu0 %v1684
  %1704 = vmatpush.bf16.msra.mxu0 %v1683
  %1705 = vmatpush.bf16.msra.mxu0 %v1682
  %1706 = vmatmul.bf16.gmra.mxu0 %v1626
  %v1707 = vpop.f32.mrf.mxu0
  %v1708 = vadd.f32 %v1648, %v1707
  %v1709 = vpop.f32.mrf.mxu0
  %v1710 = vadd.f32 %v1648, %v1709
  %1711 = vmatmul.bf16.gmra.mxu0 %v1627
  %v1712 = vpop.f32.mrf.mxu0
  %v1713 = vadd.f32 %v1648, %v1712
  %v1714 = vpop.f32.mrf.mxu0
  %v1715 = vadd.f32 %v1648, %v1714
  %1716 = vmatmul.bf16.gmra.mxu0 %v1628
  %v1717 = vpop.f32.mrf.mxu0
  %v1718 = vadd.f32 %v1648, %v1717
  %v1719 = vpop.f32.mrf.mxu0
  %v1720 = vadd.f32 %v1648, %v1719
  %1721 = vmatmul.bf16.gmra.mxu0 %v1629
  %v1722 = vpop.f32.mrf.mxu0
  %v1723 = vadd.f32 %v1648, %v1722
  %v1724 = vpop.f32.mrf.mxu0
  %v1725 = vadd.f32 %v1648, %v1724
  %1726 = vdwg.mxu0
  %1727 = vst [vmem:[%s8] sm:$0xff] %v1708
  %1728 = vst [vmem:[%s8 + $0x8] sm:$0xff] %v1710
  %1729 = vst [vmem:[%s8 + $0x10] sm:$0xff] %v1713
  %1730 = vst [vmem:[%s8 + $0x18] sm:$0xff] %v1715
  %1731 = vst [vmem:[%s8 + $0x20] sm:$0xff] %v1718
  %1732 = vst [vmem:[%s8 + $0x28] sm:$0xff] %v1720
  %1733 = vst [vmem:[%s8 + $0x30] sm:$0xff] %v1723
  %1734 = vst [vmem:[%s8 + $0x38] sm:$0xff] %v1725
  %v1735 = vlaneseq
  %v1736 = vand.u32 %v1735, 127
  %vm1737 = vcmp.lt.s32.totalorder %v1736, 8
  %v1738 = vsel %vm1737, %v1708, -1e+30
  %v1739 = vsel %vm1737, %v1710, -1e+30
  %v1740 = vsel %vm1737, %v1713, -1e+30
  %v1741 = vsel %vm1737, %v1715, -1e+30
  %v1742 = vsel %vm1737, %v1718, -1e+30
  %v1743 = vsel %vm1737, %v1720, -1e+30
  %v1744 = vsel %vm1737, %v1723, -1e+30
  %v1745 = vsel %vm1737, %v1725, -1e+30
  %1746 = vmax.xlane.f32.xlu0 %v1738
  %v1747 = vpop.xlane.xlu0 %1746
  %1748 = vmax.xlane.f32.xlu0 %v1739
  %v1749 = vpop.xlane.xlu0 %1748
  %1750 = vmax.xlane.f32.xlu0 %v1740
  %v1751 = vpop.xlane.xlu0 %1750
  %1752 = vmax.xlane.f32.xlu0 %v1741
  %v1753 = vpop.xlane.xlu0 %1752
  %1754 = vmax.xlane.f32.xlu0 %v1742
  %v1755 = vpop.xlane.xlu0 %1754
  %1756 = vmax.xlane.f32.xlu0 %v1743
  %v1757 = vpop.xlane.xlu0 %1756
  %1758 = vmax.xlane.f32.xlu0 %v1744
  %v1759 = vpop.xlane.xlu0 %1758
  %1760 = vmax.xlane.f32.xlu0 %v1745
  %v1761 = vpop.xlane.xlu0 %1760
  %v1762 = vsub.f32 %v1738, %v1747
  %v1763 = vsub.f32 %v1739, %v1749
  %v1764 = vsub.f32 %v1740, %v1751
  %v1765 = vsub.f32 %v1741, %v1753
  %v1766 = vsub.f32 %v1742, %v1755
  %v1767 = vsub.f32 %v1743, %v1757
  %v1768 = vsub.f32 %v1744, %v1759
  %v1769 = vsub.f32 %v1745, %v1761
  %v1770 = vmul.f32 %v1762, 1.442695
  %v1771 = vpow.pop %v1770
  %v1772 = vmul.f32 %v1763, 1.442695
  %v1773 = vpow.pop %v1772
  %v1774 = vmul.f32 %v1764, 1.442695
  %v1775 = vpow.pop %v1774
  %v1776 = vmul.f32 %v1765, 1.442695
  %v1777 = vpow.pop %v1776
  %v1778 = vmul.f32 %v1766, 1.442695
  %v1779 = vpow.pop %v1778
  %v1780 = vmul.f32 %v1767, 1.442695
  %v1781 = vpow.pop %v1780
  %v1782 = vmul.f32 %v1768, 1.442695
  %v1783 = vpow.pop %v1782
  %v1784 = vmul.f32 %v1769, 1.442695
  %v1785 = vpow.pop %v1784
  %1786 = vadd.xlane.f32.xlu0 %v1771
  %v1787 = vpop.xlane.xlu0 %1786
  %1788 = vadd.xlane.f32.xlu0 %v1773
  %v1789 = vpop.xlane.xlu0 %1788
  %1790 = vadd.xlane.f32.xlu0 %v1775
  %v1791 = vpop.xlane.xlu0 %1790
  %1792 = vadd.xlane.f32.xlu0 %v1777
  %v1793 = vpop.xlane.xlu0 %1792
  %1794 = vadd.xlane.f32.xlu0 %v1779
  %v1795 = vpop.xlane.xlu0 %1794
  %1796 = vadd.xlane.f32.xlu0 %v1781
  %v1797 = vpop.xlane.xlu0 %1796
  %1798 = vadd.xlane.f32.xlu0 %v1783
  %v1799 = vpop.xlane.xlu0 %1798
  %1800 = vadd.xlane.f32.xlu0 %v1785
  %v1801 = vpop.xlane.xlu0 %1800
  %v1802 = vlog2.pop %v1787
  %v1803 = vmul.f32 %v1802, 0.6931472
  %v1804 = vlog2.pop %v1789
  %v1805 = vmul.f32 %v1804, 0.6931472
  %v1806 = vlog2.pop %v1791
  %v1807 = vmul.f32 %v1806, 0.6931472
  %v1808 = vlog2.pop %v1793
  %v1809 = vmul.f32 %v1808, 0.6931472
  %v1810 = vlog2.pop %v1795
  %v1811 = vmul.f32 %v1810, 0.6931472
  %v1812 = vlog2.pop %v1797
  %v1813 = vmul.f32 %v1812, 0.6931472
  %v1814 = vlog2.pop %v1799
  %v1815 = vmul.f32 %v1814, 0.6931472
  %v1816 = vlog2.pop %v1801
  %v1817 = vmul.f32 %v1816, 0.6931472
  %v1818 = vsub.f32 %v1762, %v1803
  %v1819 = vsub.f32 %v1763, %v1805
  %v1820 = vsub.f32 %v1764, %v1807
  %v1821 = vsub.f32 %v1765, %v1809
  %v1822 = vsub.f32 %v1766, %v1811
  %v1823 = vsub.f32 %v1767, %v1813
  %v1824 = vsub.f32 %v1768, %v1815
  %v1825 = vsub.f32 %v1769, %v1817
  %v1826 = vld [vmem:[%s2] sm:$0xff]
  %v1827 = vld [vmem:[%s2 + $0x8] sm:$0xff]
  %v1828 = vld [vmem:[%s2 + $0x10] sm:$0xff]
  %v1829 = vld [vmem:[%s2 + $0x18] sm:$0xff]
  %v1830 = vld [vmem:[%s2 + $0x20] sm:$0xff]
  %v1831 = vld [vmem:[%s2 + $0x28] sm:$0xff]
  %v1832 = vld [vmem:[%s2 + $0x30] sm:$0xff]
  %v1833 = vld [vmem:[%s2 + $0x38] sm:$0xff]
  %1834 = vset.pattern.permute.xlu0 0
  %1835 = vperm.xlu0 %1834, %v1826
  %v1836 = vpop.permute.xlu0 %1835
  %1837 = vset.pattern.permute.xlu0 0
  %1838 = vperm.xlu0 %1837, %v1827
  %v1839 = vpop.permute.xlu0 %1838
  %1840 = vset.pattern.permute.xlu0 0
  %1841 = vperm.xlu0 %1840, %v1828
  %v1842 = vpop.permute.xlu0 %1841
  %1843 = vset.pattern.permute.xlu0 0
  %1844 = vperm.xlu0 %1843, %v1829
  %v1845 = vpop.permute.xlu0 %1844
  %1846 = vset.pattern.permute.xlu0 0
  %1847 = vperm.xlu0 %1846, %v1830
  %v1848 = vpop.permute.xlu0 %1847
  %1849 = vset.pattern.permute.xlu0 0
  %1850 = vperm.xlu0 %1849, %v1831
  %v1851 = vpop.permute.xlu0 %1850
  %1852 = vset.pattern.permute.xlu0 0
  %1853 = vperm.xlu0 %1852, %v1832
  %v1854 = vpop.permute.xlu0 %1853
  %1855 = vset.pattern.permute.xlu0 0
  %1856 = vperm.xlu0 %1855, %v1833
  %v1857 = vpop.permute.xlu0 %1856
  %vm1858 = vcmp.eq.s32.totalorder %v1736, %v1836
  %vm1859 = vcmp.eq.s32.totalorder %v1736, %v1839
  %vm1860 = vcmp.eq.s32.totalorder %v1736, %v1842
  %vm1861 = vcmp.eq.s32.totalorder %v1736, %v1845
  %vm1862 = vcmp.eq.s32.totalorder %v1736, %v1848
  %vm1863 = vcmp.eq.s32.totalorder %v1736, %v1851
  %vm1864 = vcmp.eq.s32.totalorder %v1736, %v1854
  %vm1865 = vcmp.eq.s32.totalorder %v1736, %v1857
  %v1866 = vsel %vm1858, 1, 0
  %v1867 = vsel %vm1859, 1, 0
  %v1868 = vsel %vm1860, 1, 0
  %v1869 = vsel %vm1861, 1, 0
  %v1870 = vsel %vm1862, 1, 0
  %v1871 = vsel %vm1863, 1, 0
  %v1872 = vsel %vm1864, 1, 0
  %v1873 = vsel %vm1865, 1, 0
  %v1874 = vcvt.s32.f32 %v1866
  %v1875 = vcvt.s32.f32 %v1867
  %v1876 = vcvt.s32.f32 %v1868
  %v1877 = vcvt.s32.f32 %v1869
  %v1878 = vcvt.s32.f32 %v1870
  %v1879 = vcvt.s32.f32 %v1871
  %v1880 = vcvt.s32.f32 %v1872
  %v1881 = vcvt.s32.f32 %v1873
  %v1882 = vmul.f32 %v1818, %v1874
  %v1883 = vmul.f32 %v1819, %v1875
  %v1884 = vmul.f32 %v1820, %v1876
  %v1885 = vmul.f32 %v1821, %v1877
  %v1886 = vmul.f32 %v1822, %v1878
  %v1887 = vmul.f32 %v1823, %v1879
  %v1888 = vmul.f32 %v1824, %v1880
  %v1889 = vmul.f32 %v1825, %v1881
  %1890 = vadd.xlane.f32.xlu0 %v1882
  %v1891 = vpop.xlane.xlu0 %1890
  %1892 = vadd.xlane.f32.xlu0 %v1883
  %v1893 = vpop.xlane.xlu0 %1892
  %1894 = vadd.xlane.f32.xlu0 %v1884
  %v1895 = vpop.xlane.xlu0 %1894
  %1896 = vadd.xlane.f32.xlu0 %v1885
  %v1897 = vpop.xlane.xlu0 %1896
  %1898 = vadd.xlane.f32.xlu0 %v1886
  %v1899 = vpop.xlane.xlu0 %1898
  %1900 = vadd.xlane.f32.xlu0 %v1887
  %v1901 = vpop.xlane.xlu0 %1900
  %1902 = vadd.xlane.f32.xlu0 %v1888
  %v1903 = vpop.xlane.xlu0 %1902
  %1904 = vadd.xlane.f32.xlu0 %v1889
  %v1905 = vpop.xlane.xlu0 %1904
  %v1906 = vsub.f32 0.0, %v1891
  %v1907 = vsub.f32 0.0, %v1893
  %v1908 = vsub.f32 0.0, %v1895
  %v1909 = vsub.f32 0.0, %v1897
  %v1910 = vsub.f32 0.0, %v1899
  %v1911 = vsub.f32 0.0, %v1901
  %v1912 = vsub.f32 0.0, %v1903
  %v1913 = vsub.f32 0.0, %v1905
  %v1914 = vld [vmem:[#allocation6] sm:$0xff]
  %v1915 = vld [vmem:[#allocation6 + $0x8] sm:$0xff]
  %v1916 = vld [vmem:[#allocation6 + $0x10] sm:$0xff]
  %v1917 = vld [vmem:[#allocation6 + $0x18] sm:$0xff]
  %v1918 = vld [vmem:[#allocation6 + $0x20] sm:$0xff]
  %v1919 = vld [vmem:[#allocation6 + $0x28] sm:$0xff]
  %v1920 = vld [vmem:[#allocation6 + $0x30] sm:$0xff]
  %v1921 = vld [vmem:[#allocation6 + $0x38] sm:$0xff]
  %v1922 = vmul.f32 %v1906, %v1914
  %v1923 = vmul.f32 %v1907, %v1915
  %v1924 = vmul.f32 %v1908, %v1916
  %v1925 = vmul.f32 %v1909, %v1917
  %v1926 = vmul.f32 %v1910, %v1918
  %v1927 = vmul.f32 %v1911, %v1919
  %v1928 = vmul.f32 %v1912, %v1920
  %v1929 = vmul.f32 %v1913, %v1921
  %v1930 = vsel %vm601, %v1922, 0.0
  %v1931 = vsel %vm601, %v1923, 0.0
  %v1932 = vadd.f32 %v1930, %v1931
  %v1933 = vsel %vm601, %v1924, 0.0
  %v1934 = vadd.f32 %v1932, %v1933
  %v1935 = vsel %vm601, %v1925, 0.0
  %v1936 = vadd.f32 %v1934, %v1935
  %v1937 = vsel %vm601, %v1926, 0.0
  %v1938 = vadd.f32 %v1936, %v1937
  %v1939 = vsel %vm601, %v1927, 0.0
  %v1940 = vadd.f32 %v1938, %v1939
  %v1941 = vsel %vm601, %v1928, 0.0
  %v1942 = vadd.f32 %v1940, %v1941
  %v1943 = vsel %vm601, %v1929, 0.0
  %v1944 = vadd.f32 %v1942, %v1943
  %1945 = vadd.xlane.f32.xlu0 %v1944
  %v1946 = vpop.xlane.xlu0 %1945
  %v1947 = vrot.slane %v1946, 4
  %v1948 = vadd.f32 %v1946, %v1947
  %v1949 = vrot.slane %v1948, 2
  %v1950 = vadd.f32 %v1948, %v1949
  %v1951 = vrot.slane %v1950, 1
  %v1952 = vadd.f32 %v1950, %v1951
  %s1953 = vtos %v1952
  %v1954 = vsel %vm601, %v1914, 0.0
  %v1955 = vsel %vm601, %v1915, 0.0
  %v1956 = vadd.f32 %v1954, %v1955
  %v1957 = vsel %vm601, %v1916, 0.0
  %v1958 = vadd.f32 %v1956, %v1957
  %v1959 = vsel %vm601, %v1917, 0.0
  %v1960 = vadd.f32 %v1958, %v1959
  %v1961 = vsel %vm601, %v1918, 0.0
  %v1962 = vadd.f32 %v1960, %v1961
  %v1963 = vsel %vm601, %v1919, 0.0
  %v1964 = vadd.f32 %v1962, %v1963
  %v1965 = vsel %vm601, %v1920, 0.0
  %v1966 = vadd.f32 %v1964, %v1965
  %v1967 = vsel %vm601, %v1921, 0.0
  %v1968 = vadd.f32 %v1966, %v1967
  %1969 = vadd.xlane.f32.xlu0 %v1968
  %v1970 = vpop.xlane.xlu0 %1969
  %v1971 = vrot.slane %v1970, 4
  %v1972 = vadd.f32 %v1970, %v1971
  %v1973 = vrot.slane %v1972, 2
  %v1974 = vadd.f32 %v1972, %v1973
  %v1975 = vrot.slane %v1974, 1
  %v1976 = vadd.f32 %v1974, %v1975
  %s1977 = vtos %v1976
  %v1978 = vstv %s1953
  %1979 = vst [vmem:[%s9] sm:$0xff] %v1978
  %v1980 = vstv %s1977
  %1981 = vst [vmem:[%s10] sm:$0xff] %v1980
  // Predicated region
  $region34: #{sequence_labeling_forward.1} parent=0 // pred_check
    _
  $region35: #{sequence_labeling_forward.1} parent=0 // pred_check_branch
    %1983 = sbr.rel (0) target = $region37
  $region36: #{sequence_labeling_forward.1} parent=0 // pred_region
    _
  $region37: #{sequence_labeling_forward.1} parent=0 // pred_fallthru
    _
  // Predicated region
  $region38: #{sequence_labeling_forward.1} parent=0 // pred_check
    _
  $region39: #{sequence_labeling_forward.1} parent=0 // pred_check_branch
    %1985 = sbr.rel (0) target = $region41
  $region40: #{sequence_labeling_forward.1} parent=0 // pred_region
    _
  $region41: #{sequence_labeling_forward.1} parent=0 // pred_fallthru
    _
  // Predicated region
  $region42: #{sequence_labeling_forward.1} parent=0 // pred_check
    _
  $region43: #{sequence_labeling_forward.1} parent=0 // pred_check_branch
    %1987 = sbr.rel (0) target = $region45
  $region44: #{sequence_labeling_forward.1} parent=0 // pred_region
    _
  $region45: #{sequence_labeling_forward.1} parent=0 // pred_fallthru
    _
  // Predicated region
  $region46: #{sequence_labeling_forward.1} parent=0 // pred_check
    _
  $region47: #{sequence_labeling_forward.1} parent=0 // pred_check_branch
    %1989 = sbr.rel (0) target = $region49
  $region48: #{sequence_labeling_forward.1} parent=0 // pred_region
    _
  $region49: #{sequence_labeling_forward.1} parent=0 // pred_fallthru
    _
  // Predicated region
  $region50: #{sequence_labeling_forward.1} parent=0 // pred_check
    _
  $region51: #{sequence_labeling_forward.1} parent=0 // pred_check_branch
    %1991 = sbr.rel (0) target = $region53
  $region52: #{sequence_labeling_forward.1} parent=0 // pred_region
    _
  $region53: #{sequence_labeling_forward.1} parent=0 // pred_fallthru
    _
  // Predicated region
  $region54: #{sequence_labeling_forward.1} parent=0 // pred_check
    _
  $region55: #{sequence_labeling_forward.1} parent=0 // pred_check_branch
    %1993 = sbr.rel (0) target = $region57
  $region56: #{sequence_labeling_forward.1} parent=0 // pred_region
    _
  $region57: #{sequence_labeling_forward.1} parent=0 // pred_fallthru
    _

</llo_original>
